<compile_context>
chip_gen: v6e
topology: v6e:2x2x1
jax: 0.10.0
libtpu: 0.0.40
codegen_flags: <defaults>
</compile_context>

<pallas_src>
import functools

import jax
import jax.numpy as jnp
from jax import lax
from jax.experimental import pallas as pl
from jax.experimental.pallas import tpu as pltpu


def _cdiv(a, b):
    return -(-a // b)


def _round_up(a, b):
    return _cdiv(a, b) * b


# ----------------------------- Pallas kernel ------------------------------- #

def _conv3d_gemm_kernel(x_main_ref, x_halo_ref, w_ref, b_ref, o_ref,
                        slab_ref, col_ref, *, tap_offs, cin_p, s_tile, l_tile):
    # x_main_ref: (1, Cin_p, s_tile)    main spatial window (flat, padded)
    # x_halo_ref: (1, Cin_p, halo_pad)  right halo window
    # w_ref     : (3, Cout, 9*Cin_p)    VMEM-resident folded weights (3 chunks)
    # b_ref     : (Cout, 1)             VMEM-resident bias (f32)
    # o_ref     : (1, Cout, s_tile)     lane-dense output tile
    # slab_ref  : (Cin_p, l_tile)       scratch: contiguous [main | halo] slab
    # col_ref   : (3, 9*Cin_p, s_tile)  scratch: folded-K GEMM operand
    slab_ref[:, :s_tile] = x_main_ref[0]
    slab_ref[:, s_tile:] = x_halo_ref[0]
    xt = slab_ref[...]                                       # (Cin_p, l_tile)

    acc = None
    for c in range(3):                                       # 3 K-chunks (kd)
        for k in range(9):                                   # 9 taps per chunk
            off = tap_offs[9 * c + k]
            shifted = xt if off == 0 else pltpu.roll(xt, shift=l_tile - off, axis=1)
            col_ref[c, k * cin_p:(k + 1) * cin_p, :] = shifted[:, :s_tile]
        part = jnp.dot(w_ref[c], col_ref[c],                 # MXU, K = 9*Cin_p
                       preferred_element_type=jnp.float32)
        acc = part if acc is None else acc + part
    o_ref[0] = (acc + b_ref[...]).astype(o_ref.dtype)


# ------------------------------ wrappers ----------------------------------- #

def maxpool3d_2x(x):
    """MaxPool3d(kernel=2, stride=2) on channels-first (N,C,D,H,W)."""
    # TODO(synk): memory-bound; left to XLA's reduce_window (review-sanctioned).
    return lax.reduce_window(x, -jnp.inf, lax.max,
                             (1, 1, 2, 2, 2), (1, 1, 2, 2, 2), "VALID")


def conv3d_3x3x3_same(x, w, b, *, s_tile=None, compute_dtype=None,
                      vmem_budget_bytes=40 * 1024 * 1024):
    """Conv3d(kernel=3, stride=1, padding=1) on channels-first (N,C,D,H,W).

    One (Cout, 9*Cin_p)x(9*Cin_p, s_tile) partial GEMM per tap-chunk per
    spatial tile; taps built on-chip from a flattened halo slab assembled in
    VMEM from a main block and a halo block of the same HBM array.
    """
    N, Cin, D, H, W = x.shape
    Cout = w.shape[-1]
    if compute_dtype is None:
        compute_dtype = x.dtype
    itemsize = jnp.dtype(compute_dtype).itemsize
    sublane = 8 * (4 // itemsize)             # 8 for f32, 16 for bf16 packing
    Cin_p = _round_up(Cin, sublane)
    Kc = 9 * Cin_p                            # per-chunk contraction size

    Dp, Hp, Wp = D + 2, H + 2, W + 2
    plane = Hp * Wp
    S_valid = D * plane
    halo = 2 * plane + 2 * Wp + 2             # largest 3x3x3 tap offset
    halo_pad = _round_up(halo, 128)           # halo block width (lane-aligned)

    # Halo-aware tile: >= 4*halo so halo duplication stays <~25%, a multiple of
    # halo_pad (halo block stays Blocked-aligned), capped by S_valid + VMEM.
    if s_tile is None:
        s_tile = max(512, 4 * halo)
    s_tile = _round_up(max(s_tile, halo_pad), halo_pad)
    s_tile = min(s_tile, _round_up(S_valid, halo_pad))
    # Explicit VMEM budget (col + slab + double-buffered in/out/weights).
    per_col = (27 * Cin_p + 3 * Cin_p) * itemsize + 2 * Cout * 4
    fixed = (3 * Cin_p * halo_pad * itemsize
             + 2 * Cout * 27 * Cin_p * itemsize + 4096)
    max_cols = (vmem_budget_bytes - fixed) // per_col
    max_cols = max(halo_pad, (max_cols // halo_pad) * halo_pad)
    s_tile = min(s_tile, max_cols)
    # TODO(synk): for very large Cin*plane even the minimal tile can exceed the
    #             budget; a K-split across grid steps would then be needed.

    n_s = _cdiv(S_valid, s_tile)
    l_tile = s_tile + halo_pad
    L_main = n_s * s_tile
    L_total = L_main + halo_pad
    r = s_tile // halo_pad                    # halo block-index multiplier

    # One light glue pass: channel pad + spatial zero-pad + flatten + cast.
    xp = jnp.pad(x, ((0, 0), (0, Cin_p - Cin), (1, 1), (1, 1), (1, 1)))
    xf = xp.reshape(N, Cin_p, Dp * plane).astype(compute_dtype)
    xf = jnp.pad(xf, ((0, 0), (0, 0), (0, L_total - Dp * plane)))

    # Weights folded tap-major / cin-minor, grouped into 3 chunks of 9 taps.
    wpad = jnp.pad(w, ((0, 0), (0, 0), (0, 0), (0, Cin_p - Cin), (0, 0)))
    w3 = (jnp.transpose(wpad, (4, 0, 1, 2, 3))
             .reshape(Cout, 3, Kc)
             .transpose(1, 0, 2)
             .astype(compute_dtype))                        # (3, Cout, 9*Cin_p)
    b2 = b.astype(jnp.float32).reshape(Cout, 1)

    tap_offs = tuple(kd * plane + kh * Wp + kw
                     for kd in range(3) for kh in range(3) for kw in range(3))
    kernel = functools.partial(_conv3d_gemm_kernel, tap_offs=tap_offs,
                               cin_p=Cin_p, s_tile=s_tile, l_tile=l_tile)

    out_flat = pl.pallas_call(
        kernel,
        out_shape=jax.ShapeDtypeStruct((N, Cout, L_main), x.dtype),
        grid=(N, n_s),
        in_specs=[
            pl.BlockSpec((1, Cin_p, s_tile), lambda n, s: (n, 0, s)),
            pl.BlockSpec((1, Cin_p, halo_pad), lambda n, s: (n, 0, (s + 1) * r)),
            pl.BlockSpec((3, Cout, Kc), lambda n, s: (0, 0, 0)),   # resident
            pl.BlockSpec((Cout, 1), lambda n, s: (0, 0)),          # resident
        ],
        out_specs=pl.BlockSpec((1, Cout, s_tile), lambda n, s: (n, 0, s)),
        scratch_shapes=[pltpu.VMEM((Cin_p, l_tile), compute_dtype),
                        pltpu.VMEM((3, Kc, s_tile), compute_dtype)],
        compiler_params=pltpu.CompilerParams(
            dimension_semantics=("parallel", "parallel"),
            vmem_limit_bytes=48 * 1024 * 1024),
    )(xf, xf, w3, b2)

    # Drop pad-plane junk rows/cols, restore (N, Cout, D, H, W).
    out = out_flat[:, :, :S_valid].reshape(N, Cout, D, Hp, Wp)
    return out[:, :, :, :H, :W]


def down_forward(x_ncdhw, params, *, s_tile=None, compute_dtype=None):
    """Down.forward: NCDHW in, NCDHW out (channels-first end to end)."""
    w1, b1, w2, b2 = params
    x = maxpool3d_2x(x_ncdhw)                                       # MaxPool3d(2)
    x = conv3d_3x3x3_same(x, w1, b1, s_tile=s_tile, compute_dtype=compute_dtype)
    x = conv3d_3x3x3_same(x, w2, b2, s_tile=s_tile, compute_dtype=compute_dtype)
    return x


# Pure-JAX reference for verification.
def down_reference(x_ncdhw, params):
    w1, b1, w2, b2 = params
    x = jnp.transpose(x_ncdhw, (0, 2, 3, 4, 1))
    x = lax.reduce_window(x, -jnp.inf, lax.max,
                          (1, 2, 2, 2, 1), (1, 2, 2, 2, 1), "VALID")
    dn = ("NDHWC", "DHWIO", "NDHWC")
    x = lax.conv_general_dilated(x, w1, (1, 1, 1), [(1, 1)] * 3,
                                 dimension_numbers=dn) + b1
    x = lax.conv_general_dilated(x, w2, (1, 1, 1), [(1, 1)] * 3,
                                 dimension_numbers=dn) + b2
    return jnp.transpose(x, (0, 4, 1, 2, 3))


if __name__ == "__main__":
    key = jax.random.PRNGKey(0)
    k1, k2, k3, k4, k5 = jax.random.split(key, 5)

    N, Cin, Cout, D, H, W = 2, 4, 8, 16, 16, 16
    x = jax.random.normal(k1, (N, Cin, D, H, W), dtype=jnp.float32)

    # Deterministic synthetic parameters (Conv3d weight semantics, DHWIO layout).
    s1 = 1.0 / (Cin * 27) ** 0.5
    s2 = 1.0 / (Cout * 27) ** 0.5
    w1 = jax.random.uniform(k2, (3, 3, 3, Cin, Cout), jnp.float32, -s1, s1)
    b1 = jax.random.uniform(k3, (Cout,), jnp.float32, -s1, s1)
    w2 = jax.random.uniform(k4, (3, 3, 3, Cout, Cout), jnp.float32, -s2, s2)
    b2 = jax.random.uniform(k5, (Cout,), jnp.float32, -s2, s2)
    params = (w1, b1, w2, b2)

    ref = down_reference(x, params)
    expect_shape = (N, Cout, D // 2, H // 2, W // 2)

    # f32 path with a forced small tile: exercises the multi-tile grid and the
    # cross-tile main-block + halo-block stitching.
    fwd32 = jax.jit(functools.partial(down_forward, s_tile=128))
    out32 = jax.block_until_ready(fwd32(x, params))
    assert out32.shape == expect_shape, out32.shape
    err32 = float(jnp.max(jnp.abs(out32 - ref)))
    assert jnp.allclose(out32, ref, atol=1e-4, rtol=1e-4), err32

    # bf16 compute path (v6e/v7x MXU-native), auto halo-aware tile.
    fwd16 = jax.jit(functools.partial(down_forward, compute_dtype=jnp.bfloat16))
    out16 = jax.block_until_ready(fwd16(x, params))
    assert out16.shape == expect_shape, out16.shape
    err16 = float(jnp.max(jnp.abs(out16 - ref)))
    assert err16 < 0.1, err16

    print("KERNEL_OK")
</pallas_src>

<mosaic_0001>
module attributes {stable_mosaic.version = 11 : i64} {
  func.func @_conv3d_gemm_kernel(%arg0: i32, %arg1: i32, %arg2: memref<1x8x256xf32, #tpu.memory_space<vmem>>, %arg3: memref<1x8x256xf32, #tpu.memory_space<vmem>>, %arg4: memref<3x8x72xf32, #tpu.memory_space<vmem>>, %arg5: memref<8x1xf32, #tpu.memory_space<vmem>>, %arg6: memref<1x8x256xf32, #tpu.memory_space<vmem>>, %arg7: memref<8x512xf32, #tpu.memory_space<vmem>>, %arg8: memref<3x72x256xf32, #tpu.memory_space<vmem>>) attributes {dimension_semantics = [#tpu.dimension_semantics<parallel>, #tpu.dimension_semantics<parallel>], iteration_bounds = array<i64: 2, 4>, scalar_prefetch = 0 : i64, scratch_operands = 2 : i64, tpu.core_type = #tpu.core_type<tc>, window_params = [{transform_indices = @transform_0, window_bounds = array<i64: 1, 8, 256>}, {transform_indices = @transform_1, window_bounds = array<i64: 1, 8, 256>}, {pipeline_mode = #tpu.pipeline_mode<synchronous>, transform_indices = @transform_2, window_bounds = array<i64: 3, 8, 72>}, {pipeline_mode = #tpu.pipeline_mode<synchronous>, transform_indices = @transform_3, window_bounds = array<i64: 8, 1>}, {transform_indices = @transform_4, window_bounds = array<i64: 1, 8, 256>}]} {
    %c0 = arith.constant 0 : index
    %c0_0 = arith.constant 0 : index
    %c0_1 = arith.constant 0 : index
    %0 = vector.load %arg2[%c0, %c0_0, %c0_1] : memref<1x8x256xf32, #tpu.memory_space<vmem>>, vector<1x8x256xf32>
    %1 = vector.shape_cast %0 : vector<1x8x256xf32> to vector<8x256xf32>
    %c0_2 = arith.constant 0 : index
    %c0_3 = arith.constant 0 : index
    %2 = vector.load %arg7[%c0_2, %c0_3] : memref<8x512xf32, #tpu.memory_space<vmem>>, vector<8x256xf32>
    tpu.vector_store %arg7[%c0_2, %c0_3], %1 {strides = array<i32>} : memref<8x512xf32, #tpu.memory_space<vmem>>, vector<8x256xf32>,
    %c0_4 = arith.constant 0 : index
    %c0_5 = arith.constant 0 : index
    %c0_6 = arith.constant 0 : index
    %3 = vector.load %arg3[%c0_4, %c0_5, %c0_6] : memref<1x8x256xf32, #tpu.memory_space<vmem>>, vector<1x8x256xf32>
    %4 = vector.shape_cast %3 : vector<1x8x256xf32> to vector<8x256xf32>
    %c0_7 = arith.constant 0 : index
    %c256 = arith.constant 256 : index
    %5 = vector.load %arg7[%c0_7, %c256] : memref<8x512xf32, #tpu.memory_space<vmem>>, vector<8x256xf32>
    tpu.vector_store %arg7[%c0_7, %c256], %4 {strides = array<i32>} : memref<8x512xf32, #tpu.memory_space<vmem>>, vector<8x256xf32>,
    %c0_8 = arith.constant 0 : index
    %c0_9 = arith.constant 0 : index
    %6 = vector.load %arg7[%c0_8, %c0_9] : memref<8x512xf32, #tpu.memory_space<vmem>>, vector<8x512xf32>
    %7 = vector.extract_strided_slice %6 {offsets = [0, 0], sizes = [8, 256], strides = [1, 1]} : vector<8x512xf32> to vector<8x256xf32>
    %c0_10 = arith.constant 0 : index
    %c0_11 = arith.constant 0 : index
    %c0_12 = arith.constant 0 : index
    %8 = vector.load %arg8[%c0_10, %c0_11, %c0_12] : memref<3x72x256xf32, #tpu.memory_space<vmem>>, vector<1x8x256xf32>
    %9 = vector.shape_cast %8 : vector<1x8x256xf32> to vector<8x256xf32>
    %10 = vector.shape_cast %7 : vector<8x256xf32> to vector<1x8x256xf32>
    tpu.vector_store %arg8[%c0_10, %c0_11, %c0_12], %10 {strides = array<i32>} : memref<3x72x256xf32, #tpu.memory_space<vmem>>, vector<1x8x256xf32>,
    %c511_i32 = arith.constant 511 : i32
    %11 = tpu.dynamic_rotate %6 by %c511_i32 dim 1 : vector<8x512xf32>, i32 -> vector<8x512xf32>
    %12 = vector.extract_strided_slice %11 {offsets = [0, 0], sizes = [8, 256], strides = [1, 1]} : vector<8x512xf32> to vector<8x256xf32>
    %c0_13 = arith.constant 0 : index
    %c8 = arith.constant 8 : index
    %c0_14 = arith.constant 0 : index
    %13 = vector.load %arg8[%c0_13, %c8, %c0_14] : memref<3x72x256xf32, #tpu.memory_space<vmem>>, vector<1x8x256xf32>
    %14 = vector.shape_cast %13 : vector<1x8x256xf32> to vector<8x256xf32>
    %15 = vector.shape_cast %12 : vector<8x256xf32> to vector<1x8x256xf32>
    tpu.vector_store %arg8[%c0_13, %c8, %c0_14], %15 {strides = array<i32>} : memref<3x72x256xf32, #tpu.memory_space<vmem>>, vector<1x8x256xf32>,
    %c510_i32 = arith.constant 510 : i32
    %16 = tpu.dynamic_rotate %6 by %c510_i32 dim 1 : vector<8x512xf32>, i32 -> vector<8x512xf32>
    %17 = vector.extract_strided_slice %16 {offsets = [0, 0], sizes = [8, 256], strides = [1, 1]} : vector<8x512xf32> to vector<8x256xf32>
    %c0_15 = arith.constant 0 : index
    %c16 = arith.constant 16 : index
    %c0_16 = arith.constant 0 : index
    %18 = vector.load %arg8[%c0_15, %c16, %c0_16] : memref<3x72x256xf32, #tpu.memory_space<vmem>>, vector<1x8x256xf32>
    %19 = vector.shape_cast %18 : vector<1x8x256xf32> to vector<8x256xf32>
    %20 = vector.shape_cast %17 : vector<8x256xf32> to vector<1x8x256xf32>
    tpu.vector_store %arg8[%c0_15, %c16, %c0_16], %20 {strides = array<i32>} : memref<3x72x256xf32, #tpu.memory_space<vmem>>, vector<1x8x256xf32>,
    %c502_i32 = arith.constant 502 : i32
    %21 = tpu.dynamic_rotate %6 by %c502_i32 dim 1 : vector<8x512xf32>, i32 -> vector<8x512xf32>
    %22 = vector.extract_strided_slice %21 {offsets = [0, 0], sizes = [8, 256], strides = [1, 1]} : vector<8x512xf32> to vector<8x256xf32>
    %c0_17 = arith.constant 0 : index
    %c24 = arith.constant 24 : index
    %c0_18 = arith.constant 0 : index
    %23 = vector.load %arg8[%c0_17, %c24, %c0_18] : memref<3x72x256xf32, #tpu.memory_space<vmem>>, vector<1x8x256xf32>
    %24 = vector.shape_cast %23 : vector<1x8x256xf32> to vector<8x256xf32>
    %25 = vector.shape_cast %22 : vector<8x256xf32> to vector<1x8x256xf32>
    tpu.vector_store %arg8[%c0_17, %c24, %c0_18], %25 {strides = array<i32>} : memref<3x72x256xf32, #tpu.memory_space<vmem>>, vector<1x8x256xf32>,
    %c501_i32 = arith.constant 501 : i32
    %26 = tpu.dynamic_rotate %6 by %c501_i32 dim 1 : vector<8x512xf32>, i32 -> vector<8x512xf32>
    %27 = vector.extract_strided_slice %26 {offsets = [0, 0], sizes = [8, 256], strides = [1, 1]} : vector<8x512xf32> to vector<8x256xf32>
    %c0_19 = arith.constant 0 : index
    %c32 = arith.constant 32 : index
    %c0_20 = arith.constant 0 : index
    %28 = vector.load %arg8[%c0_19, %c32, %c0_20] : memref<3x72x256xf32, #tpu.memory_space<vmem>>, vector<1x8x256xf32>
    %29 = vector.shape_cast %28 : vector<1x8x256xf32> to vector<8x256xf32>
    %30 = vector.shape_cast %27 : vector<8x256xf32> to vector<1x8x256xf32>
    tpu.vector_store %arg8[%c0_19, %c32, %c0_20], %30 {strides = array<i32>} : memref<3x72x256xf32, #tpu.memory_space<vmem>>, vector<1x8x256xf32>,
    %c500_i32 = arith.constant 500 : i32
    %31 = tpu.dynamic_rotate %6 by %c500_i32 dim 1 : vector<8x512xf32>, i32 -> vector<8x512xf32>
    %32 = vector.extract_strided_slice %31 {offsets = [0, 0], sizes = [8, 256], strides = [1, 1]} : vector<8x512xf32> to vector<8x256xf32>
    %c0_21 = arith.constant 0 : index
    %c40 = arith.constant 40 : index
    %c0_22 = arith.constant 0 : index
    %33 = vector.load %arg8[%c0_21, %c40, %c0_22] : memref<3x72x256xf32, #tpu.memory_space<vmem>>, vector<1x8x256xf32>
    %34 = vector.shape_cast %33 : vector<1x8x256xf32> to vector<8x256xf32>
    %35 = vector.shape_cast %32 : vector<8x256xf32> to vector<1x8x256xf32>
    tpu.vector_store %arg8[%c0_21, %c40, %c0_22], %35 {strides = array<i32>} : memref<3x72x256xf32, #tpu.memory_space<vmem>>, vector<1x8x256xf32>,
    %c492_i32 = arith.constant 492 : i32
    %36 = tpu.dynamic_rotate %6 by %c492_i32 dim 1 : vector<8x512xf32>, i32 -> vector<8x512xf32>
    %37 = vector.extract_strided_slice %36 {offsets = [0, 0], sizes = [8, 256], strides = [1, 1]} : vector<8x512xf32> to vector<8x256xf32>
    %c0_23 = arith.constant 0 : index
    %c48 = arith.constant 48 : index
    %c0_24 = arith.constant 0 : index
    %38 = vector.load %arg8[%c0_23, %c48, %c0_24] : memref<3x72x256xf32, #tpu.memory_space<vmem>>, vector<1x8x256xf32>
    %39 = vector.shape_cast %38 : vector<1x8x256xf32> to vector<8x256xf32>
    %40 = vector.shape_cast %37 : vector<8x256xf32> to vector<1x8x256xf32>
    tpu.vector_store %arg8[%c0_23, %c48, %c0_24], %40 {strides = array<i32>} : memref<3x72x256xf32, #tpu.memory_space<vmem>>, vector<1x8x256xf32>,
    %c491_i32 = arith.constant 491 : i32
    %41 = tpu.dynamic_rotate %6 by %c491_i32 dim 1 : vector<8x512xf32>, i32 -> vector<8x512xf32>
    %42 = vector.extract_strided_slice %41 {offsets = [0, 0], sizes = [8, 256], strides = [1, 1]} : vector<8x512xf32> to vector<8x256xf32>
    %c0_25 = arith.constant 0 : index
    %c56 = arith.constant 56 : index
    %c0_26 = arith.constant 0 : index
    %43 = vector.load %arg8[%c0_25, %c56, %c0_26] : memref<3x72x256xf32, #tpu.memory_space<vmem>>, vector<1x8x256xf32>
    %44 = vector.shape_cast %43 : vector<1x8x256xf32> to vector<8x256xf32>
    %45 = vector.shape_cast %42 : vector<8x256xf32> to vector<1x8x256xf32>
    tpu.vector_store %arg8[%c0_25, %c56, %c0_26], %45 {strides = array<i32>} : memref<3x72x256xf32, #tpu.memory_space<vmem>>, vector<1x8x256xf32>,
    %c490_i32 = arith.constant 490 : i32
    %46 = tpu.dynamic_rotate %6 by %c490_i32 dim 1 : vector<8x512xf32>, i32 -> vector<8x512xf32>
    %47 = vector.extract_strided_slice %46 {offsets = [0, 0], sizes = [8, 256], strides = [1, 1]} : vector<8x512xf32> to vector<8x256xf32>
    %c0_27 = arith.constant 0 : index
    %c64 = arith.constant 64 : index
    %c0_28 = arith.constant 0 : index
    %48 = vector.load %arg8[%c0_27, %c64, %c0_28] : memref<3x72x256xf32, #tpu.memory_space<vmem>>, vector<1x8x256xf32>
    %49 = vector.shape_cast %48 : vector<1x8x256xf32> to vector<8x256xf32>
    %50 = vector.shape_cast %47 : vector<8x256xf32> to vector<1x8x256xf32>
    tpu.vector_store %arg8[%c0_27, %c64, %c0_28], %50 {strides = array<i32>} : memref<3x72x256xf32, #tpu.memory_space<vmem>>, vector<1x8x256xf32>,
    %c0_29 = arith.constant 0 : index
    %c0_30 = arith.constant 0 : index
    %c0_31 = arith.constant 0 : index
    %51 = vector.load %arg4[%c0_29, %c0_30, %c0_31] : memref<3x8x72xf32, #tpu.memory_space<vmem>>, vector<1x8x72xf32>
    %52 = vector.shape_cast %51 : vector<1x8x72xf32> to vector<8x72xf32>
    %c0_32 = arith.constant 0 : index
    %c0_33 = arith.constant 0 : index
    %c0_34 = arith.constant 0 : index
    %53 = vector.load %arg8[%c0_32, %c0_33, %c0_34] : memref<3x72x256xf32, #tpu.memory_space<vmem>>, vector<1x72x256xf32>
    %54 = vector.shape_cast %53 : vector<1x72x256xf32> to vector<72x256xf32>
    %cst = arith.constant dense<0.000000e+00> : vector<8x256xf32>
    %55 = tpu.matmul %52, %54, %cst {dimension_numbers = #tpu.dot_dimension_numbers<[1], [0], [0], [1], [0, 0, 1, 1], [], []>} : vector<8x72xf32>, vector<72x256xf32>, vector<8x256xf32> -> vector<8x256xf32>
    %c412_i32 = arith.constant 412 : i32
    %56 = tpu.dynamic_rotate %6 by %c412_i32 dim 1 : vector<8x512xf32>, i32 -> vector<8x512xf32>
    %57 = vector.extract_strided_slice %56 {offsets = [0, 0], sizes = [8, 256], strides = [1, 1]} : vector<8x512xf32> to vector<8x256xf32>
    %c1 = arith.constant 1 : index
    %c0_35 = arith.constant 0 : index
    %c0_36 = arith.constant 0 : index
    %58 = vector.load %arg8[%c1, %c0_35, %c0_36] : memref<3x72x256xf32, #tpu.memory_space<vmem>>, vector<1x8x256xf32>
    %59 = vector.shape_cast %58 : vector<1x8x256xf32> to vector<8x256xf32>
    %60 = vector.shape_cast %57 : vector<8x256xf32> to vector<1x8x256xf32>
    tpu.vector_store %arg8[%c1, %c0_35, %c0_36], %60 {strides = array<i32>} : memref<3x72x256xf32, #tpu.memory_space<vmem>>, vector<1x8x256xf32>,
    %c411_i32 = arith.constant 411 : i32
    %61 = tpu.dynamic_rotate %6 by %c411_i32 dim 1 : vector<8x512xf32>, i32 -> vector<8x512xf32>
    %62 = vector.extract_strided_slice %61 {offsets = [0, 0], sizes = [8, 256], strides = [1, 1]} : vector<8x512xf32> to vector<8x256xf32>
    %c1_37 = arith.constant 1 : index
    %c8_38 = arith.constant 8 : index
    %c0_39 = arith.constant 0 : index
    %63 = vector.load %arg8[%c1_37, %c8_38, %c0_39] : memref<3x72x256xf32, #tpu.memory_space<vmem>>, vector<1x8x256xf32>
    %64 = vector.shape_cast %63 : vector<1x8x256xf32> to vector<8x256xf32>
    %65 = vector.shape_cast %62 : vector<8x256xf32> to vector<1x8x256xf32>
    tpu.vector_store %arg8[%c1_37, %c8_38, %c0_39], %65 {strides = array<i32>} : memref<3x72x256xf32, #tpu.memory_space<vmem>>, vector<1x8x256xf32>,
    %c410_i32 = arith.constant 410 : i32
    %66 = tpu.dynamic_rotate %6 by %c410_i32 dim 1 : vector<8x512xf32>, i32 -> vector<8x512xf32>
    %67 = vector.extract_strided_slice %66 {offsets = [0, 0], sizes = [8, 256], strides = [1, 1]} : vector<8x512xf32> to vector<8x256xf32>
    %c1_40 = arith.constant 1 : index
    %c16_41 = arith.constant 16 : index
    %c0_42 = arith.constant 0 : index
    %68 = vector.load %arg8[%c1_40, %c16_41, %c0_42] : memref<3x72x256xf32, #tpu.memory_space<vmem>>, vector<1x8x256xf32>
    %69 = vector.shape_cast %68 : vector<1x8x256xf32> to vector<8x256xf32>
    %70 = vector.shape_cast %67 : vector<8x256xf32> to vector<1x8x256xf32>
    tpu.vector_store %arg8[%c1_40, %c16_41, %c0_42], %70 {strides = array<i32>} : memref<3x72x256xf32, #tpu.memory_space<vmem>>, vector<1x8x256xf32>,
    %c402_i32 = arith.constant 402 : i32
    %71 = tpu.dynamic_rotate %6 by %c402_i32 dim 1 : vector<8x512xf32>, i32 -> vector<8x512xf32>
    %72 = vector.extract_strided_slice %71 {offsets = [0, 0], sizes = [8, 256], strides = [1, 1]} : vector<8x512xf32> to vector<8x256xf32>
    %c1_43 = arith.constant 1 : index
    %c24_44 = arith.constant 24 : index
    %c0_45 = arith.constant 0 : index
    %73 = vector.load %arg8[%c1_43, %c24_44, %c0_45] : memref<3x72x256xf32, #tpu.memory_space<vmem>>, vector<1x8x256xf32>
    %74 = vector.shape_cast %73 : vector<1x8x256xf32> to vector<8x256xf32>
    %75 = vector.shape_cast %72 : vector<8x256xf32> to vector<1x8x256xf32>
    tpu.vector_store %arg8[%c1_43, %c24_44, %c0_45], %75 {strides = array<i32>} : memref<3x72x256xf32, #tpu.memory_space<vmem>>, vector<1x8x256xf32>,
    %c401_i32 = arith.constant 401 : i32
    %76 = tpu.dynamic_rotate %6 by %c401_i32 dim 1 : vector<8x512xf32>, i32 -> vector<8x512xf32>
    %77 = vector.extract_strided_slice %76 {offsets = [0, 0], sizes = [8, 256], strides = [1, 1]} : vector<8x512xf32> to vector<8x256xf32>
    %c1_46 = arith.constant 1 : index
    %c32_47 = arith.constant 32 : index
    %c0_48 = arith.constant 0 : index
    %78 = vector.load %arg8[%c1_46, %c32_47, %c0_48] : memref<3x72x256xf32, #tpu.memory_space<vmem>>, vector<1x8x256xf32>
    %79 = vector.shape_cast %78 : vector<1x8x256xf32> to vector<8x256xf32>
    %80 = vector.shape_cast %77 : vector<8x256xf32> to vector<1x8x256xf32>
    tpu.vector_store %arg8[%c1_46, %c32_47, %c0_48], %80 {strides = array<i32>} : memref<3x72x256xf32, #tpu.memory_space<vmem>>, vector<1x8x256xf32>,
    %c400_i32 = arith.constant 400 : i32
    %81 = tpu.dynamic_rotate %6 by %c400_i32 dim 1 : vector<8x512xf32>, i32 -> vector<8x512xf32>
    %82 = vector.extract_strided_slice %81 {offsets = [0, 0], sizes = [8, 256], strides = [1, 1]} : vector<8x512xf32> to vector<8x256xf32>
    %c1_49 = arith.constant 1 : index
    %c40_50 = arith.constant 40 : index
    %c0_51 = arith.constant 0 : index
    %83 = vector.load %arg8[%c1_49, %c40_50, %c0_51] : memref<3x72x256xf32, #tpu.memory_space<vmem>>, vector<1x8x256xf32>
    %84 = vector.shape_cast %83 : vector<1x8x256xf32> to vector<8x256xf32>
    %85 = vector.shape_cast %82 : vector<8x256xf32> to vector<1x8x256xf32>
    tpu.vector_store %arg8[%c1_49, %c40_50, %c0_51], %85 {strides = array<i32>} : memref<3x72x256xf32, #tpu.memory_space<vmem>>, vector<1x8x256xf32>,
    %c392_i32 = arith.constant 392 : i32
    %86 = tpu.dynamic_rotate %6 by %c392_i32 dim 1 : vector<8x512xf32>, i32 -> vector<8x512xf32>
    %87 = vector.extract_strided_slice %86 {offsets = [0, 0], sizes = [8, 256], strides = [1, 1]} : vector<8x512xf32> to vector<8x256xf32>
    %c1_52 = arith.constant 1 : index
    %c48_53 = arith.constant 48 : index
    %c0_54 = arith.constant 0 : index
    %88 = vector.load %arg8[%c1_52, %c48_53, %c0_54] : memref<3x72x256xf32, #tpu.memory_space<vmem>>, vector<1x8x256xf32>
    %89 = vector.shape_cast %88 : vector<1x8x256xf32> to vector<8x256xf32>
    %90 = vector.shape_cast %87 : vector<8x256xf32> to vector<1x8x256xf32>
    tpu.vector_store %arg8[%c1_52, %c48_53, %c0_54], %90 {strides = array<i32>} : memref<3x72x256xf32, #tpu.memory_space<vmem>>, vector<1x8x256xf32>,
    %c391_i32 = arith.constant 391 : i32
    %91 = tpu.dynamic_rotate %6 by %c391_i32 dim 1 : vector<8x512xf32>, i32 -> vector<8x512xf32>
    %92 = vector.extract_strided_slice %91 {offsets = [0, 0], sizes = [8, 256], strides = [1, 1]} : vector<8x512xf32> to vector<8x256xf32>
    %c1_55 = arith.constant 1 : index
    %c56_56 = arith.constant 56 : index
    %c0_57 = arith.constant 0 : index
    %93 = vector.load %arg8[%c1_55, %c56_56, %c0_57] : memref<3x72x256xf32, #tpu.memory_space<vmem>>, vector<1x8x256xf32>
    %94 = vector.shape_cast %93 : vector<1x8x256xf32> to vector<8x256xf32>
    %95 = vector.shape_cast %92 : vector<8x256xf32> to vector<1x8x256xf32>
    tpu.vector_store %arg8[%c1_55, %c56_56, %c0_57], %95 {strides = array<i32>} : memref<3x72x256xf32, #tpu.memory_space<vmem>>, vector<1x8x256xf32>,
    %c390_i32 = arith.constant 390 : i32
    %96 = tpu.dynamic_rotate %6 by %c390_i32 dim 1 : vector<8x512xf32>, i32 -> vector<8x512xf32>
    %97 = vector.extract_strided_slice %96 {offsets = [0, 0], sizes = [8, 256], strides = [1, 1]} : vector<8x512xf32> to vector<8x256xf32>
    %c1_58 = arith.constant 1 : index
    %c64_59 = arith.constant 64 : index
    %c0_60 = arith.constant 0 : index
    %98 = vector.load %arg8[%c1_58, %c64_59, %c0_60] : memref<3x72x256xf32, #tpu.memory_space<vmem>>, vector<1x8x256xf32>
    %99 = vector.shape_cast %98 : vector<1x8x256xf32> to vector<8x256xf32>
    %100 = vector.shape_cast %97 : vector<8x256xf32> to vector<1x8x256xf32>
    tpu.vector_store %arg8[%c1_58, %c64_59, %c0_60], %100 {strides = array<i32>} : memref<3x72x256xf32, #tpu.memory_space<vmem>>, vector<1x8x256xf32>,
    %c1_61 = arith.constant 1 : index
    %c0_62 = arith.constant 0 : index
    %c0_63 = arith.constant 0 : index
    %101 = vector.load %arg4[%c1_61, %c0_62, %c0_63] : memref<3x8x72xf32, #tpu.memory_space<vmem>>, vector<1x8x72xf32>
    %102 = vector.shape_cast %101 : vector<1x8x72xf32> to vector<8x72xf32>
    %c1_64 = arith.constant 1 : index
    %c0_65 = arith.constant 0 : index
    %c0_66 = arith.constant 0 : index
    %103 = vector.load %arg8[%c1_64, %c0_65, %c0_66] : memref<3x72x256xf32, #tpu.memory_space<vmem>>, vector<1x72x256xf32>
    %104 = vector.shape_cast %103 : vector<1x72x256xf32> to vector<72x256xf32>
    %cst_67 = arith.constant dense<0.000000e+00> : vector<8x256xf32>
    %105 = tpu.matmul %102, %104, %cst_67 {dimension_numbers = #tpu.dot_dimension_numbers<[1], [0], [0], [1], [0, 0, 1, 1], [], []>} : vector<8x72xf32>, vector<72x256xf32>, vector<8x256xf32> -> vector<8x256xf32>
    %106 = arith.addf %55, %105 : vector<8x256xf32>
    %c312_i32 = arith.constant 312 : i32
    %107 = tpu.dynamic_rotate %6 by %c312_i32 dim 1 : vector<8x512xf32>, i32 -> vector<8x512xf32>
    %108 = vector.extract_strided_slice %107 {offsets = [0, 0], sizes = [8, 256], strides = [1, 1]} : vector<8x512xf32> to vector<8x256xf32>
    %c2 = arith.constant 2 : index
    %c0_68 = arith.constant 0 : index
    %c0_69 = arith.constant 0 : index
    %109 = vector.load %arg8[%c2, %c0_68, %c0_69] : memref<3x72x256xf32, #tpu.memory_space<vmem>>, vector<1x8x256xf32>
    %110 = vector.shape_cast %109 : vector<1x8x256xf32> to vector<8x256xf32>
    %111 = vector.shape_cast %108 : vector<8x256xf32> to vector<1x8x256xf32>
    tpu.vector_store %arg8[%c2, %c0_68, %c0_69], %111 {strides = array<i32>} : memref<3x72x256xf32, #tpu.memory_space<vmem>>, vector<1x8x256xf32>,
    %c311_i32 = arith.constant 311 : i32
    %112 = tpu.dynamic_rotate %6 by %c311_i32 dim 1 : vector<8x512xf32>, i32 -> vector<8x512xf32>
    %113 = vector.extract_strided_slice %112 {offsets = [0, 0], sizes = [8, 256], strides = [1, 1]} : vector<8x512xf32> to vector<8x256xf32>
    %c2_70 = arith.constant 2 : index
    %c8_71 = arith.constant 8 : index
    %c0_72 = arith.constant 0 : index
    %114 = vector.load %arg8[%c2_70, %c8_71, %c0_72] : memref<3x72x256xf32, #tpu.memory_space<vmem>>, vector<1x8x256xf32>
    %115 = vector.shape_cast %114 : vector<1x8x256xf32> to vector<8x256xf32>
    %116 = vector.shape_cast %113 : vector<8x256xf32> to vector<1x8x256xf32>
    tpu.vector_store %arg8[%c2_70, %c8_71, %c0_72], %116 {strides = array<i32>} : memref<3x72x256xf32, #tpu.memory_space<vmem>>, vector<1x8x256xf32>,
    %c310_i32 = arith.constant 310 : i32
    %117 = tpu.dynamic_rotate %6 by %c310_i32 dim 1 : vector<8x512xf32>, i32 -> vector<8x512xf32>
    %118 = vector.extract_strided_slice %117 {offsets = [0, 0], sizes = [8, 256], strides = [1, 1]} : vector<8x512xf32> to vector<8x256xf32>
    %c2_73 = arith.constant 2 : index
    %c16_74 = arith.constant 16 : index
    %c0_75 = arith.constant 0 : index
    %119 = vector.load %arg8[%c2_73, %c16_74, %c0_75] : memref<3x72x256xf32, #tpu.memory_space<vmem>>, vector<1x8x256xf32>
    %120 = vector.shape_cast %119 : vector<1x8x256xf32> to vector<8x256xf32>
    %121 = vector.shape_cast %118 : vector<8x256xf32> to vector<1x8x256xf32>
    tpu.vector_store %arg8[%c2_73, %c16_74, %c0_75], %121 {strides = array<i32>} : memref<3x72x256xf32, #tpu.memory_space<vmem>>, vector<1x8x256xf32>,
    %c302_i32 = arith.constant 302 : i32
    %122 = tpu.dynamic_rotate %6 by %c302_i32 dim 1 : vector<8x512xf32>, i32 -> vector<8x512xf32>
    %123 = vector.extract_strided_slice %122 {offsets = [0, 0], sizes = [8, 256], strides = [1, 1]} : vector<8x512xf32> to vector<8x256xf32>
    %c2_76 = arith.constant 2 : index
    %c24_77 = arith.constant 24 : index
    %c0_78 = arith.constant 0 : index
    %124 = vector.load %arg8[%c2_76, %c24_77, %c0_78] : memref<3x72x256xf32, #tpu.memory_space<vmem>>, vector<1x8x256xf32>
    %125 = vector.shape_cast %124 : vector<1x8x256xf32> to vector<8x256xf32>
    %126 = vector.shape_cast %123 : vector<8x256xf32> to vector<1x8x256xf32>
    tpu.vector_store %arg8[%c2_76, %c24_77, %c0_78], %126 {strides = array<i32>} : memref<3x72x256xf32, #tpu.memory_space<vmem>>, vector<1x8x256xf32>,
    %c301_i32 = arith.constant 301 : i32
    %127 = tpu.dynamic_rotate %6 by %c301_i32 dim 1 : vector<8x512xf32>, i32 -> vector<8x512xf32>
    %128 = vector.extract_strided_slice %127 {offsets = [0, 0], sizes = [8, 256], strides = [1, 1]} : vector<8x512xf32> to vector<8x256xf32>
    %c2_79 = arith.constant 2 : index
    %c32_80 = arith.constant 32 : index
    %c0_81 = arith.constant 0 : index
    %129 = vector.load %arg8[%c2_79, %c32_80, %c0_81] : memref<3x72x256xf32, #tpu.memory_space<vmem>>, vector<1x8x256xf32>
    %130 = vector.shape_cast %129 : vector<1x8x256xf32> to vector<8x256xf32>
    %131 = vector.shape_cast %128 : vector<8x256xf32> to vector<1x8x256xf32>
    tpu.vector_store %arg8[%c2_79, %c32_80, %c0_81], %131 {strides = array<i32>} : memref<3x72x256xf32, #tpu.memory_space<vmem>>, vector<1x8x256xf32>,
    %c300_i32 = arith.constant 300 : i32
    %132 = tpu.dynamic_rotate %6 by %c300_i32 dim 1 : vector<8x512xf32>, i32 -> vector<8x512xf32>
    %133 = vector.extract_strided_slice %132 {offsets = [0, 0], sizes = [8, 256], strides = [1, 1]} : vector<8x512xf32> to vector<8x256xf32>
    %c2_82 = arith.constant 2 : index
    %c40_83 = arith.constant 40 : index
    %c0_84 = arith.constant 0 : index
    %134 = vector.load %arg8[%c2_82, %c40_83, %c0_84] : memref<3x72x256xf32, #tpu.memory_space<vmem>>, vector<1x8x256xf32>
    %135 = vector.shape_cast %134 : vector<1x8x256xf32> to vector<8x256xf32>
    %136 = vector.shape_cast %133 : vector<8x256xf32> to vector<1x8x256xf32>
    tpu.vector_store %arg8[%c2_82, %c40_83, %c0_84], %136 {strides = array<i32>} : memref<3x72x256xf32, #tpu.memory_space<vmem>>, vector<1x8x256xf32>,
    %c292_i32 = arith.constant 292 : i32
    %137 = tpu.dynamic_rotate %6 by %c292_i32 dim 1 : vector<8x512xf32>, i32 -> vector<8x512xf32>
    %138 = vector.extract_strided_slice %137 {offsets = [0, 0], sizes = [8, 256], strides = [1, 1]} : vector<8x512xf32> to vector<8x256xf32>
    %c2_85 = arith.constant 2 : index
    %c48_86 = arith.constant 48 : index
    %c0_87 = arith.constant 0 : index
    %139 = vector.load %arg8[%c2_85, %c48_86, %c0_87] : memref<3x72x256xf32, #tpu.memory_space<vmem>>, vector<1x8x256xf32>
    %140 = vector.shape_cast %139 : vector<1x8x256xf32> to vector<8x256xf32>
    %141 = vector.shape_cast %138 : vector<8x256xf32> to vector<1x8x256xf32>
    tpu.vector_store %arg8[%c2_85, %c48_86, %c0_87], %141 {strides = array<i32>} : memref<3x72x256xf32, #tpu.memory_space<vmem>>, vector<1x8x256xf32>,
    %c291_i32 = arith.constant 291 : i32
    %142 = tpu.dynamic_rotate %6 by %c291_i32 dim 1 : vector<8x512xf32>, i32 -> vector<8x512xf32>
    %143 = vector.extract_strided_slice %142 {offsets = [0, 0], sizes = [8, 256], strides = [1, 1]} : vector<8x512xf32> to vector<8x256xf32>
    %c2_88 = arith.constant 2 : index
    %c56_89 = arith.constant 56 : index
    %c0_90 = arith.constant 0 : index
    %144 = vector.load %arg8[%c2_88, %c56_89, %c0_90] : memref<3x72x256xf32, #tpu.memory_space<vmem>>, vector<1x8x256xf32>
    %145 = vector.shape_cast %144 : vector<1x8x256xf32> to vector<8x256xf32>
    %146 = vector.shape_cast %143 : vector<8x256xf32> to vector<1x8x256xf32>
    tpu.vector_store %arg8[%c2_88, %c56_89, %c0_90], %146 {strides = array<i32>} : memref<3x72x256xf32, #tpu.memory_space<vmem>>, vector<1x8x256xf32>,
    %c290_i32 = arith.constant 290 : i32
    %147 = tpu.dynamic_rotate %6 by %c290_i32 dim 1 : vector<8x512xf32>, i32 -> vector<8x512xf32>
    %148 = vector.extract_strided_slice %147 {offsets = [0, 0], sizes = [8, 256], strides = [1, 1]} : vector<8x512xf32> to vector<8x256xf32>
    %c2_91 = arith.constant 2 : index
    %c64_92 = arith.constant 64 : index
    %c0_93 = arith.constant 0 : index
    %149 = vector.load %arg8[%c2_91, %c64_92, %c0_93] : memref<3x72x256xf32, #tpu.memory_space<vmem>>, vector<1x8x256xf32>
    %150 = vector.shape_cast %149 : vector<1x8x256xf32> to vector<8x256xf32>
    %151 = vector.shape_cast %148 : vector<8x256xf32> to vector<1x8x256xf32>
    tpu.vector_store %arg8[%c2_91, %c64_92, %c0_93], %151 {strides = array<i32>} : memref<3x72x256xf32, #tpu.memory_space<vmem>>, vector<1x8x256xf32>,
    %c2_94 = arith.constant 2 : index
    %c0_95 = arith.constant 0 : index
    %c0_96 = arith.constant 0 : index
    %152 = vector.load %arg4[%c2_94, %c0_95, %c0_96] : memref<3x8x72xf32, #tpu.memory_space<vmem>>, vector<1x8x72xf32>
    %153 = vector.shape_cast %152 : vector<1x8x72xf32> to vector<8x72xf32>
    %c2_97 = arith.constant 2 : index
    %c0_98 = arith.constant 0 : index
    %c0_99 = arith.constant 0 : index
    %154 = vector.load %arg8[%c2_97, %c0_98, %c0_99] : memref<3x72x256xf32, #tpu.memory_space<vmem>>, vector<1x72x256xf32>
    %155 = vector.shape_cast %154 : vector<1x72x256xf32> to vector<72x256xf32>
    %cst_100 = arith.constant dense<0.000000e+00> : vector<8x256xf32>
    %156 = tpu.matmul %153, %155, %cst_100 {dimension_numbers = #tpu.dot_dimension_numbers<[1], [0], [0], [1], [0, 0, 1, 1], [], []>} : vector<8x72xf32>, vector<72x256xf32>, vector<8x256xf32> -> vector<8x256xf32>
    %157 = arith.addf %106, %156 : vector<8x256xf32>
    %c0_101 = arith.constant 0 : index
    %c0_102 = arith.constant 0 : index
    %158 = vector.load %arg5[%c0_101, %c0_102] : memref<8x1xf32, #tpu.memory_space<vmem>>, vector<8x1xf32>
    %159 = vector.broadcast %158 : vector<8x1xf32> to vector<8x256xf32>
    %160 = arith.addf %157, %159 : vector<8x256xf32>
    %c0_103 = arith.constant 0 : index
    %c0_104 = arith.constant 0 : index
    %c0_105 = arith.constant 0 : index
    %161 = vector.load %arg6[%c0_103, %c0_104, %c0_105] : memref<1x8x256xf32, #tpu.memory_space<vmem>>, vector<1x8x256xf32>
    %162 = vector.shape_cast %161 : vector<1x8x256xf32> to vector<8x256xf32>
    %163 = vector.shape_cast %160 : vector<8x256xf32> to vector<1x8x256xf32>
    tpu.vector_store %arg6[%c0_103, %c0_104, %c0_105], %163 {strides = array<i32>} : memref<1x8x256xf32, #tpu.memory_space<vmem>>, vector<1x8x256xf32>,
    return
  }
  func.func @transform_0(%arg0: i32, %arg1: i32) -> (i32, i32, i32) {
    %c0_i32 = arith.constant 0 : i32
    %c0_i32_0 = arith.constant 0 : i32
    return %arg0, %c0_i32, %arg1 : i32, i32, i32
  }
  func.func @transform_1(%arg0: i32, %arg1: i32) -> (i32, i32, i32) {
    %c1_i32 = arith.constant 1 : i32
    %0 = arith.addi %arg1, %c1_i32 : i32
    %c1_i32_0 = arith.constant 1 : i32
    %1 = arith.muli %0, %c1_i32_0 : i32
    %c0_i32 = arith.constant 0 : i32
    %c0_i32_1 = arith.constant 0 : i32
    return %arg0, %c0_i32, %1 : i32, i32, i32
  }
  func.func @transform_2(%arg0: i32, %arg1: i32) -> (i32, i32, i32) {
    %c0_i32 = arith.constant 0 : i32
    %c0_i32_0 = arith.constant 0 : i32
    %c0_i32_1 = arith.constant 0 : i32
    %c0_i32_2 = arith.constant 0 : i32
    return %c0_i32, %c0_i32_0, %c0_i32_1 : i32, i32, i32
  }
  func.func @transform_3(%arg0: i32, %arg1: i32) -> (i32, i32) {
    %c0_i32 = arith.constant 0 : i32
    %c0_i32_0 = arith.constant 0 : i32
    %c0_i32_1 = arith.constant 0 : i32
    return %c0_i32, %c0_i32_0 : i32, i32
  }
  func.func @transform_4(%arg0: i32, %arg1: i32) -> (i32, i32, i32) {
    %c0_i32 = arith.constant 0 : i32
    %c0_i32_0 = arith.constant 0 : i32
    return %arg0, %c0_i32, %arg1 : i32, i32, i32
  }
}

</mosaic_0001>

<llo_original>
// kernel: down_forward.2
$region0: #{down_forward.2}
  #allocation0 [shape = 'u32[]', space=smem, size = 0x4, offset = 0x4, fixed_abs, tag = 'smem constant byte address 0x4 - core index']
  #allocation1 [shape = 'u32[144,128]{1,0:T(1,128)}', space=vmem, size = 0x12000, scoped, tag = 'internal scratch']
  #allocation2 [shape = 'f32[8,512]{1,0:T(8,128)}', space=vmem, size = 0x4000, scoped, tag = 'scratch operand']
  #allocation3 [shape = 'f32[3,72,256]{2,1,0:T(8,128)}', space=vmem, size = 0x36000, scoped, tag = 'scratch operand']
  %s0 = inlined_call_operand.vmem [shape: f32[2,8,1280], index: 0, kind: input, shape index: {}, may-alias: {0,1}]
  %s1 = inlined_call_operand.vmem [shape: f32[2,8,1280], index: 1, kind: input, shape index: {}, may-alias: {0,1}]
  %s2 = inlined_call_operand.vmem [shape: f32[3,8,72], index: 2, kind: input, shape index: {}]
  %s3 = inlined_call_operand.vmem [shape: f32[8,1], index: 3, kind: input, shape index: {}]
  %s4 = inlined_call_operand.vmem [shape: f32[2,8,1024], index: 4, kind: output, shape index: {}]
  %s5 = sld [smem:[#allocation0]]
  $region49: #{down_forward.2} parent=0
    _
  %s7 = ssub.s32 1, %s5
  %s8 = scalar_select 0, %s7, %s5
  loop: start=0, step=1, limit=10
  $region2: #{down_forward.2} parent=0 // loop_pre_header
    _
  $region3: #{down_forward.2} parent=0 // loop_header
    %s10 = sphi 0, %s14
    %p11 = scmp.ge.s32.totalorder %s10, 10
    %s17 = sphi 0, %s29
    %s18 = sphi 0, %s25
    %s19 = sphi 0, %s17
    %s20 = sphi 0, %s18
    %s21 = sphi 0, %s19
    %s22 = sphi 0, %s20
    %s34 = sphi 0, %s36
    %s37 = sphi 0, %s34
    %s38 = sphi 0, %s37
    %s54 = sphi 0, %s38
    %s64 = sphi 0, %s66
    %s67 = sphi 0, %s64
    %s68 = sphi 0, %s67
    %s84 = sphi 0, %s68
    %s88 = sphi 0, %s88
    %s90 = sphi 0, %s88
    %s91 = sphi 0, %s90
    %s105 = sphi 0, %s91
    %s109 = sphi 0, %s109
    %s111 = sphi 0, %s109
    %s112 = sphi 0, %s111
    %s126 = sphi 0, %s112
    %s134 = sphi 0, %s136
    %s137 = sphi 0, %s134
    %s138 = sphi 0, %s137
    %s154 = sphi 0, %s138
  $region4: #{down_forward.2} parent=0 // loop_header_branch
    %13 = sbr.rel (%p11) target = $region8
  $region5: #{down_forward.2} parent=0 // loop_body
    %s15 = ssub.s32 %s10, 1
    %s16 = ssub.s32 %s10, 2
    %s23 = sadd.s32 1, %s18
    %p24 = scmp.ge.s32.totalorder %s23, 4
    %s25 = scalar_select %p24, 0, %s23
    %s26 = sadd.s32 1, %s17
    %s27 = scalar_select %p24, %s26, %s17
    %p28 = scmp.ge.s32.totalorder %s27, 2
    %s29 = scalar_select %p28, 0, %s27
    %s30 = ssub.s32 %s17, %s29
    %s31 = ssub.s32 %s18, %s25
    %s32 = sor.u32 %s30, %s31
    %p33 = scmp.eq.s32.totalorder %s32, 0
    %s35 = sadd.s32 %s34, 1
    %s36 = scalar_select %p33, %s34, %s35
    %p39 = pneg %p33
    %p40 = scmp.eq.s32.totalorder %s10, 7
    %p41 = por %p39, %p40
    %p42 = scmp.ne.s32.totalorder %s34, %s37
    %p43 = scmp.eq.s32.totalorder %s10, 0
    %p44 = por %p42, %p43
    %p45 = scmp.ne.s32.totalorder %s34, %s37
    %p46 = scmp.eq.s32.totalorder %s15, 7
    %p47 = por %p45, %p46
    %p48 = scmp.ne.s32.totalorder %s37, %s38
    %p49 = scmp.eq.s32.totalorder %s15, 0
    %p50 = por %p48, %p49
    %p51 = scmp.ne.s32.totalorder %s37, %s38
    %p52 = scmp.eq.s32.totalorder %s16, 7
    %p53 = por %p51, %p52
    %p55 = scmp.ne.s32.totalorder %s38, %s54
    %p56 = scmp.eq.s32.totalorder %s16, 0
    %p57 = por %p55, %p56
    %s58 = sadd.s32 %s18, 1
    %s59 = sadd.s32 %s25, 1
    %s60 = ssub.s32 %s17, %s29
    %s61 = ssub.s32 %s58, %s59
    %s62 = sor.u32 %s60, %s61
    %p63 = scmp.eq.s32.totalorder %s62, 0
    %s65 = sadd.s32 %s64, 1
    %s66 = scalar_select %p63, %s64, %s65
    %p69 = pneg %p63
    %p70 = scmp.eq.s32.totalorder %s10, 7
    %p71 = por %p69, %p70
    %p72 = scmp.ne.s32.totalorder %s64, %s67
    %p73 = scmp.eq.s32.totalorder %s10, 0
    %p74 = por %p72, %p73
    %p75 = scmp.ne.s32.totalorder %s64, %s67
    %p76 = scmp.eq.s32.totalorder %s15, 7
    %p77 = por %p75, %p76
    %p78 = scmp.ne.s32.totalorder %s67, %s68
    %p79 = scmp.eq.s32.totalorder %s15, 0
    %p80 = por %p78, %p79
    %p81 = scmp.ne.s32.totalorder %s67, %s68
    %p82 = scmp.eq.s32.totalorder %s16, 7
    %p83 = por %p81, %p82
    %p85 = scmp.ne.s32.totalorder %s68, %s84
    %p86 = scmp.eq.s32.totalorder %s16, 0
    %p87 = por %p85, %p86
    %s89 = sadd.s32 %s88, 1
    %p92 = scmp.eq.s32.totalorder %s10, 7
    %p93 = scmp.ne.s32.totalorder %s88, %s90
    %p94 = scmp.eq.s32.totalorder %s10, 0
    %p95 = por %p93, %p94
    %p96 = scmp.ne.s32.totalorder %s88, %s90
    %p97 = scmp.eq.s32.totalorder %s15, 7
    %p98 = por %p96, %p97
    %p99 = scmp.ne.s32.totalorder %s90, %s91
    %p100 = scmp.eq.s32.totalorder %s15, 0
    %p101 = por %p99, %p100
    %p102 = scmp.ne.s32.totalorder %s90, %s91
    %p103 = scmp.eq.s32.totalorder %s16, 7
    %p104 = por %p102, %p103
    %p106 = scmp.ne.s32.totalorder %s91, %s105
    %p107 = scmp.eq.s32.totalorder %s16, 0
    %p108 = por %p106, %p107
    %s110 = sadd.s32 %s109, 1
    %p113 = scmp.eq.s32.totalorder %s10, 7
    %p114 = scmp.ne.s32.totalorder %s109, %s111
    %p115 = scmp.eq.s32.totalorder %s10, 0
    %p116 = por %p114, %p115
    %p117 = scmp.ne.s32.totalorder %s109, %s111
    %p118 = scmp.eq.s32.totalorder %s15, 7
    %p119 = por %p117, %p118
    %p120 = scmp.ne.s32.totalorder %s111, %s112
    %p121 = scmp.eq.s32.totalorder %s15, 0
    %p122 = por %p120, %p121
    %p123 = scmp.ne.s32.totalorder %s111, %s112
    %p124 = scmp.eq.s32.totalorder %s16, 7
    %p125 = por %p123, %p124
    %p127 = scmp.ne.s32.totalorder %s112, %s126
    %p128 = scmp.eq.s32.totalorder %s16, 0
    %p129 = por %p127, %p128
    %s130 = ssub.s32 %s17, %s29
    %s131 = ssub.s32 %s18, %s25
    %s132 = sor.u32 %s130, %s131
    %p133 = scmp.eq.s32.totalorder %s132, 0
    %s135 = sadd.s32 %s134, 1
    %s136 = scalar_select %p133, %s134, %s135
    %p139 = pneg %p133
    %p140 = scmp.eq.s32.totalorder %s10, 7
    %p141 = por %p139, %p140
    %p142 = scmp.ne.s32.totalorder %s134, %s137
    %p143 = scmp.eq.s32.totalorder %s10, 0
    %p144 = por %p142, %p143
    %p145 = scmp.ne.s32.totalorder %s134, %s137
    %p146 = scmp.eq.s32.totalorder %s15, 7
    %p147 = por %p145, %p146
    %p148 = scmp.ne.s32.totalorder %s137, %s138
    %p149 = scmp.eq.s32.totalorder %s15, 0
    %p150 = por %p148, %p149
    %p151 = scmp.ne.s32.totalorder %s137, %s138
    %p152 = scmp.eq.s32.totalorder %s16, 7
    %p153 = por %p151, %p152
    %p155 = scmp.ne.s32.totalorder %s138, %s154
    %p156 = scmp.eq.s32.totalorder %s16, 0
    %p157 = por %p155, %p156
    %p158 = scmp.le.s32.totalorder 1, %s10
    %p159 = scmp.lt.s32.totalorder %s10, 9
    %p160 = pnand %p158, %p159
    %p161 = pneg %p160
    // Predicated region
    $region9: #{down_forward.2} parent=5 // pred_check
      _
    $region10: #{down_forward.2} parent=5 // pred_check_branch
      %163 = sbr.rel (%p160) target = $region12
    $region11: #{down_forward.2} parent=5 // pred_region
      %s164 = ssub.s32 %s10, 1
      // Predicated region
      $region13: #{down_forward.2} parent=11 // pred_check
        %p165 = pneg %p101
      $region14: #{down_forward.2} parent=11 // pred_check_branch
        %167 = sbr.rel (%p165) target = $region16
      $region15: #{down_forward.2} parent=11 // pred_region
        _
      $region16: #{down_forward.2} parent=11 // pred_fallthru
        _
      // Predicated region
      $region17: #{down_forward.2} parent=11 // pred_check
        %p168 = pneg %p122
      $region18: #{down_forward.2} parent=11 // pred_check_branch
        %170 = sbr.rel (%p168) target = $region20
      $region19: #{down_forward.2} parent=11 // pred_region
        _
      $region20: #{down_forward.2} parent=11 // pred_fallthru
        _
    $region12: #{down_forward.2} parent=5 // pred_fallthru
      _
    %p171 = scmp.lt.s32.totalorder %s10, 8
    // Predicated region
    $region21: #{down_forward.2} parent=5 // pred_check
      %p172 = pneg %p171
    $region22: #{down_forward.2} parent=5 // pred_check_branch
      %174 = sbr.rel (%p172) target = $region24
    $region23: #{down_forward.2} parent=5 // pred_region
      // Predicated region
      $region25: #{down_forward.2} parent=23 // pred_check
        %p175 = pneg %p44
      $region26: #{down_forward.2} parent=23 // pred_check_branch
        %177 = sbr.rel (%p175) target = $region28
      $region27: #{down_forward.2} parent=23 // pred_region
        %s178 = smul.u32 2, %s18
        %p179 = scmp.lt.s32.totalorder %s17, 1
        %s180 = scalar_select %p179, %s17, 1
        %p181 = scmp.lt.s32.totalorder %s178, 9
        %s182 = scalar_select %p181, %s178, 9
        %s183 = smul.addr %s180, 10
        %s184 = sadd.s32 %s182, %s183
        %s185 = smul.addr %s184, 8
        %s186 = scalar_lea.vmem %s0, %s185
        %s187 = smul.u32 2, %s18
      $region28: #{down_forward.2} parent=23 // pred_fallthru
        _
      // Predicated region
      $region29: #{down_forward.2} parent=23 // pred_check
        %p188 = pneg %p74
      $region30: #{down_forward.2} parent=23 // pred_check_branch
        %190 = sbr.rel (%p188) target = $region32
      $region31: #{down_forward.2} parent=23 // pred_region
        %s191 = sadd.s32 %s18, 1
        %s192 = smul.u32 2, %s191
        %p193 = scmp.lt.s32.totalorder %s17, 1
        %s194 = scalar_select %p193, %s17, 1
        %p195 = scmp.lt.s32.totalorder %s192, 9
        %s196 = scalar_select %p195, %s192, 9
        %s197 = smul.addr %s194, 10
        %s198 = sadd.s32 %s196, %s197
        %s199 = smul.addr %s198, 8
        %s200 = scalar_lea.vmem %s1, %s199
        %s201 = sadd.s32 %s18, 1
        %s202 = smul.u32 2, %s201
      $region32: #{down_forward.2} parent=23 // pred_fallthru
        _
    $region24: #{down_forward.2} parent=5 // pred_fallthru
      _
    %p203 = scmp.le.s32.totalorder 1, %s10
    %p204 = scmp.lt.s32.totalorder %s10, 9
    %p205 = pnand %p203, %p204
    %p206 = pneg %p205
    // Predicated region
    $region33: #{down_forward.2} parent=5 // pred_check
      _
    $region34: #{down_forward.2} parent=5 // pred_check_branch
      %208 = sbr.rel (%p205) target = $region36
    $region35: #{down_forward.2} parent=5 // pred_region
      %s209 = ssub.s32 %s10, 1
      %s210 = smul.u32 2, %s20
      %p211 = scmp.lt.s32.totalorder %s19, 1
      %s212 = scalar_select %p211, %s19, 1
      %p213 = scmp.lt.s32.totalorder %s210, 9
      %s214 = scalar_select %p213, %s210, 9
      %s215 = smul.addr %s212, 10
      %s216 = sadd.s32 %s214, %s215
      %s217 = smul.addr %s216, 8
      %s218 = scalar_lea.vmem %s0, %s217
      %p219 = pneg %p50
      %p220 = pneg %p47
      %s221 = sadd.s32 %s20, 1
      %s222 = smul.u32 2, %s221
      %p223 = scmp.lt.s32.totalorder %s19, 1
      %s224 = scalar_select %p223, %s19, 1
      %p225 = scmp.lt.s32.totalorder %s222, 9
      %s226 = scalar_select %p225, %s222, 9
      %s227 = smul.addr %s224, 10
      %s228 = sadd.s32 %s226, %s227
      %s229 = smul.addr %s228, 8
      %s230 = scalar_lea.vmem %s1, %s229
      %p231 = pneg %p80
      %p232 = pneg %p77
      %p233 = pneg %p101
      %p234 = pneg %p98
      %p235 = pneg %p122
      %p236 = pneg %p119
      %p237 = pneg %p150
      %p238 = pneg %p147
      %s239 = smul.u32 2, %s20
      %p240 = scmp.lt.s32.totalorder %s19, 1
      %s241 = scalar_select %p240, %s19, 1
      %p242 = scmp.lt.s32.totalorder %s239, 7
      %s243 = scalar_select %p242, %s239, 7
      %s244 = smul.addr %s241, 8
      %s245 = sadd.s32 %s243, %s244
      %s246 = smul.addr %s245, 8
      %s247 = scalar_lea.vmem %s4, %s246
      %s248 = smul.u32 2, %s20
      %p249 = scmp.lt.s32.totalorder %s19, 1
      %s250 = scalar_select %p249, %s19, 1
      %p251 = scmp.lt.s32.totalorder %s248, 9
      %s252 = scalar_select %p251, %s248, 9
      %s253 = smul.addr %s250, 10
      %s254 = sadd.s32 %s252, %s253
      %s255 = smul.addr %s254, 8
      %s256 = scalar_lea.vmem %s0, %s255
      %s257 = smul.u32 2, %s20
      %s258 = sadd.s32 %s20, 1
      %s259 = smul.u32 2, %s258
      %p260 = scmp.lt.s32.totalorder %s19, 1
      %s261 = scalar_select %p260, %s19, 1
      %p262 = scmp.lt.s32.totalorder %s259, 9
      %s263 = scalar_select %p262, %s259, 9
      %s264 = smul.addr %s261, 10
      %s265 = sadd.s32 %s263, %s264
      %s266 = smul.addr %s265, 8
      %s267 = scalar_lea.vmem %s1, %s266
      %s268 = sadd.s32 %s20, 1
      %s269 = smul.u32 2, %s268
      %s270 = smul.u32 2, %s20
      %p271 = scmp.lt.s32.totalorder %s19, 1
      %s272 = scalar_select %p271, %s19, 1
      %p273 = scmp.lt.s32.totalorder %s270, 7
      %s274 = scalar_select %p273, %s270, 7
      %s275 = smul.addr %s272, 8
      %s276 = sadd.s32 %s274, %s275
      %s277 = smul.addr %s276, 8
      %s278 = scalar_lea.vmem %s4, %s277
      %s279 = smul.u32 2, %s20
      %v280 = vld [vmem:[%s256] sm:$0xff]
      %v281 = vld [vmem:[%s256 + $0x8] sm:$0xff]
      %282 = vst [vmem:[#allocation2] sm:$0xff] %v280
      %283 = vst [vmem:[#allocation2 + $0x8] sm:$0xff] %v281
      %v284 = vld [vmem:[%s267] sm:$0xff]
      %v285 = vld [vmem:[%s267 + $0x8] sm:$0xff]
      %286 = vst [vmem:[#allocation2 + $0x10] sm:$0xff] %v284
      %287 = vst [vmem:[#allocation2 + $0x18] sm:$0xff] %v285
      %v288 = vld [vmem:[#allocation2] sm:$0xff]
      %v289 = vld [vmem:[#allocation2 + $0x8] sm:$0xff]
      %v290 = vld [vmem:[#allocation2 + $0x10] sm:$0xff]
      %v291 = vld [vmem:[#allocation2 + $0x18] sm:$0xff]
      %292 = vst [vmem:[#allocation3] sm:$0xff] %v288
      %293 = vst [vmem:[#allocation3 + $0x8] sm:$0xff] %v289
      %294 = vrot.lane.b32.xlu0 %v288, 127
      %v295 = vpop.permute.xlu0 %294
      %296 = vrot.lane.b32.xlu0 %v289, 127
      %v297 = vpop.permute.xlu0 %296
      %298 = vrot.lane.b32.xlu0 %v290, 127
      %v299 = vpop.permute.xlu0 %298
      %v300 = vlaneseq
      %v301 = vand.u32 %v300, 127
      %vm302 = vcmp.lt.s32.totalorder %v301, 127
      %v303 = vsel %vm302, %v297, %v299
      %v304 = vsel %vm302, %v295, %v297
      %305 = vst [vmem:[#allocation3 + $0x10] sm:$0xff] %v304
      %306 = vst [vmem:[#allocation3 + $0x18] sm:$0xff] %v303
      %307 = vrot.lane.b32.xlu0 %v288, 126
      %v308 = vpop.permute.xlu0 %307
      %309 = vrot.lane.b32.xlu0 %v289, 126
      %v310 = vpop.permute.xlu0 %309
      %311 = vrot.lane.b32.xlu0 %v290, 126
      %v312 = vpop.permute.xlu0 %311
      %vm313 = vcmp.lt.s32.totalorder %v301, 126
      %v314 = vsel %vm313, %v310, %v312
      %v315 = vsel %vm313, %v308, %v310
      %316 = vst [vmem:[#allocation3 + $0x20] sm:$0xff] %v315
      %317 = vst [vmem:[#allocation3 + $0x28] sm:$0xff] %v314
      %318 = vrot.lane.b32.xlu0 %v288, 118
      %v319 = vpop.permute.xlu0 %318
      %320 = vrot.lane.b32.xlu0 %v289, 118
      %v321 = vpop.permute.xlu0 %320
      %322 = vrot.lane.b32.xlu0 %v290, 118
      %v323 = vpop.permute.xlu0 %322
      %vm324 = vcmp.lt.s32.totalorder %v301, 118
      %v325 = vsel %vm324, %v321, %v323
      %v326 = vsel %vm324, %v319, %v321
      %327 = vst [vmem:[#allocation3 + $0x30] sm:$0xff] %v326
      %328 = vst [vmem:[#allocation3 + $0x38] sm:$0xff] %v325
      %329 = vrot.lane.b32.xlu0 %v288, 117
      %v330 = vpop.permute.xlu0 %329
      %331 = vrot.lane.b32.xlu0 %v289, 117
      %v332 = vpop.permute.xlu0 %331
      %333 = vrot.lane.b32.xlu0 %v290, 117
      %v334 = vpop.permute.xlu0 %333
      %vm335 = vcmp.lt.s32.totalorder %v301, 117
      %v336 = vsel %vm335, %v332, %v334
      %v337 = vsel %vm335, %v330, %v332
      %338 = vst [vmem:[#allocation3 + $0x40] sm:$0xff] %v337
      %339 = vst [vmem:[#allocation3 + $0x48] sm:$0xff] %v336
      %340 = vrot.lane.b32.xlu0 %v288, 116
      %v341 = vpop.permute.xlu0 %340
      %342 = vrot.lane.b32.xlu0 %v289, 116
      %v343 = vpop.permute.xlu0 %342
      %344 = vrot.lane.b32.xlu0 %v290, 116
      %v345 = vpop.permute.xlu0 %344
      %vm346 = vcmp.lt.s32.totalorder %v301, 116
      %v347 = vsel %vm346, %v343, %v345
      %v348 = vsel %vm346, %v341, %v343
      %349 = vst [vmem:[#allocation3 + $0x50] sm:$0xff] %v348
      %350 = vst [vmem:[#allocation3 + $0x58] sm:$0xff] %v347
      %351 = vrot.lane.b32.xlu0 %v288, 108
      %v352 = vpop.permute.xlu0 %351
      %353 = vrot.lane.b32.xlu0 %v289, 108
      %v354 = vpop.permute.xlu0 %353
      %355 = vrot.lane.b32.xlu0 %v290, 108
      %v356 = vpop.permute.xlu0 %355
      %vm357 = vcmp.lt.s32.totalorder %v301, 108
      %v358 = vsel %vm357, %v354, %v356
      %v359 = vsel %vm357, %v352, %v354
      %360 = vst [vmem:[#allocation3 + $0x60] sm:$0xff] %v359
      %361 = vst [vmem:[#allocation3 + $0x68] sm:$0xff] %v358
      %362 = vrot.lane.b32.xlu0 %v288, 107
      %v363 = vpop.permute.xlu0 %362
      %364 = vrot.lane.b32.xlu0 %v289, 107
      %v365 = vpop.permute.xlu0 %364
      %366 = vrot.lane.b32.xlu0 %v290, 107
      %v367 = vpop.permute.xlu0 %366
      %vm368 = vcmp.lt.s32.totalorder %v301, 107
      %v369 = vsel %vm368, %v365, %v367
      %v370 = vsel %vm368, %v363, %v365
      %371 = vst [vmem:[#allocation3 + $0x70] sm:$0xff] %v370
      %372 = vst [vmem:[#allocation3 + $0x78] sm:$0xff] %v369
      %373 = vrot.lane.b32.xlu0 %v288, 106
      %v374 = vpop.permute.xlu0 %373
      %375 = vrot.lane.b32.xlu0 %v289, 106
      %v376 = vpop.permute.xlu0 %375
      %377 = vrot.lane.b32.xlu0 %v290, 106
      %v378 = vpop.permute.xlu0 %377
      %vm379 = vcmp.lt.s32.totalorder %v301, 106
      %v380 = vsel %vm379, %v376, %v378
      %v381 = vsel %vm379, %v374, %v376
      %382 = vst [vmem:[#allocation3 + $0x80] sm:$0xff] %v381
      %383 = vst [vmem:[#allocation3 + $0x88] sm:$0xff] %v380
      %v384 = vld [vmem:[%s2] sm:$0xff]
      %v385 = vld [vmem:[#allocation3] sm:$0xff]
      %v386 = vld [vmem:[#allocation3 + $0x8] sm:$0xff]
      %v387 = vld [vmem:[#allocation3 + $0x10] sm:$0xff]
      %v388 = vld [vmem:[#allocation3 + $0x18] sm:$0xff]
      %v389 = vld [vmem:[#allocation3 + $0x20] sm:$0xff]
      %v390 = vld [vmem:[#allocation3 + $0x28] sm:$0xff]
      %v391 = vld [vmem:[#allocation3 + $0x30] sm:$0xff]
      %v392 = vld [vmem:[#allocation3 + $0x38] sm:$0xff]
      %v393 = vld [vmem:[#allocation3 + $0x40] sm:$0xff]
      %v394 = vld [vmem:[#allocation3 + $0x48] sm:$0xff]
      %v395 = vld [vmem:[#allocation3 + $0x50] sm:$0xff]
      %v396 = vld [vmem:[#allocation3 + $0x58] sm:$0xff]
      %v397 = vld [vmem:[#allocation3 + $0x60] sm:$0xff]
      %v398 = vld [vmem:[#allocation3 + $0x68] sm:$0xff]
      %v399 = vld [vmem:[#allocation3 + $0x70] sm:$0xff]
      %v400 = vld [vmem:[#allocation3 + $0x78] sm:$0xff]
      %v401 = vld [vmem:[#allocation3 + $0x80] sm:$0xff]
      %v402 = vld [vmem:[#allocation3 + $0x88] sm:$0xff]
      %403 = vrot.lane.b32.xlu0 %v288, 28
      %v404 = vpop.permute.xlu0 %403
      %405 = vrot.lane.b32.xlu0 %v289, 28
      %v406 = vpop.permute.xlu0 %405
      %407 = vrot.lane.b32.xlu0 %v290, 28
      %v408 = vpop.permute.xlu0 %407
      %vm409 = vcmp.lt.s32.totalorder %v301, 28
      %v410 = vsel %vm409, %v406, %v408
      %v411 = vsel %vm409, %v404, %v406
      %s412 = scalar_lea.vmem [#allocation3], 144
      %413 = vst [vmem:[%s412] sm:$0xff] %v411
      %414 = vst [vmem:[%s412 + $0x8] sm:$0xff] %v410
      %415 = vrot.lane.b32.xlu0 %v288, 27
      %v416 = vpop.permute.xlu0 %415
      %417 = vrot.lane.b32.xlu0 %v289, 27
      %v418 = vpop.permute.xlu0 %417
      %419 = vrot.lane.b32.xlu0 %v290, 27
      %v420 = vpop.permute.xlu0 %419
      %vm421 = vcmp.lt.s32.totalorder %v301, 27
      %v422 = vsel %vm421, %v418, %v420
      %v423 = vsel %vm421, %v416, %v418
      %424 = vst [vmem:[%s412 + $0x10] sm:$0xff] %v423
      %425 = vst [vmem:[%s412 + $0x18] sm:$0xff] %v422
      %426 = vrot.lane.b32.xlu0 %v288, 26
      %v427 = vpop.permute.xlu0 %426
      %428 = vrot.lane.b32.xlu0 %v289, 26
      %v429 = vpop.permute.xlu0 %428
      %430 = vrot.lane.b32.xlu0 %v290, 26
      %v431 = vpop.permute.xlu0 %430
      %vm432 = vcmp.lt.s32.totalorder %v301, 26
      %v433 = vsel %vm432, %v429, %v431
      %v434 = vsel %vm432, %v427, %v429
      %435 = vst [vmem:[%s412 + $0x20] sm:$0xff] %v434
      %436 = vst [vmem:[%s412 + $0x28] sm:$0xff] %v433
      %437 = vrot.lane.b32.xlu0 %v288, 18
      %v438 = vpop.permute.xlu0 %437
      %439 = vrot.lane.b32.xlu0 %v289, 18
      %v440 = vpop.permute.xlu0 %439
      %441 = vrot.lane.b32.xlu0 %v290, 18
      %v442 = vpop.permute.xlu0 %441
      %vm443 = vcmp.lt.s32.totalorder %v301, 18
      %v444 = vsel %vm443, %v440, %v442
      %v445 = vsel %vm443, %v438, %v440
      %446 = vst [vmem:[%s412 + $0x30] sm:$0xff] %v445
      %447 = vst [vmem:[%s412 + $0x38] sm:$0xff] %v444
      %448 = vrot.lane.b32.xlu0 %v288, 17
      %v449 = vpop.permute.xlu0 %448
      %450 = vrot.lane.b32.xlu0 %v289, 17
      %v451 = vpop.permute.xlu0 %450
      %452 = vrot.lane.b32.xlu0 %v290, 17
      %v453 = vpop.permute.xlu0 %452
      %vm454 = vcmp.lt.s32.totalorder %v301, 17
      %v455 = vsel %vm454, %v451, %v453
      %v456 = vsel %vm454, %v449, %v451
      %457 = vst [vmem:[%s412 + $0x40] sm:$0xff] %v456
      %458 = vst [vmem:[%s412 + $0x48] sm:$0xff] %v455
      %459 = vrot.lane.b32.xlu0 %v288, 16
      %v460 = vpop.permute.xlu0 %459
      %461 = vrot.lane.b32.xlu0 %v289, 16
      %v462 = vpop.permute.xlu0 %461
      %463 = vrot.lane.b32.xlu0 %v290, 16
      %v464 = vpop.permute.xlu0 %463
      %vm465 = vcmp.lt.s32.totalorder %v301, 16
      %v466 = vsel %vm465, %v462, %v464
      %v467 = vsel %vm465, %v460, %v462
      %468 = vst [vmem:[%s412 + $0x50] sm:$0xff] %v467
      %469 = vst [vmem:[%s412 + $0x58] sm:$0xff] %v466
      %470 = vrot.lane.b32.xlu0 %v288, 8
      %v471 = vpop.permute.xlu0 %470
      %472 = vrot.lane.b32.xlu0 %v289, 8
      %v473 = vpop.permute.xlu0 %472
      %474 = vrot.lane.b32.xlu0 %v290, 8
      %v475 = vpop.permute.xlu0 %474
      %vm476 = vcmp.lt.s32.totalorder %v301, 8
      %v477 = vsel %vm476, %v473, %v475
      %v478 = vsel %vm476, %v471, %v473
      %479 = vst [vmem:[%s412 + $0x60] sm:$0xff] %v478
      %480 = vst [vmem:[%s412 + $0x68] sm:$0xff] %v477
      %481 = vrot.lane.b32.xlu0 %v288, 7
      %v482 = vpop.permute.xlu0 %481
      %483 = vrot.lane.b32.xlu0 %v289, 7
      %v484 = vpop.permute.xlu0 %483
      %485 = vrot.lane.b32.xlu0 %v290, 7
      %v486 = vpop.permute.xlu0 %485
      %vm487 = vcmp.lt.s32.totalorder %v301, 7
      %v488 = vsel %vm487, %v484, %v486
      %v489 = vsel %vm487, %v482, %v484
      %490 = vst [vmem:[%s412 + $0x70] sm:$0xff] %v489
      %491 = vst [vmem:[%s412 + $0x78] sm:$0xff] %v488
      %492 = vrot.lane.b32.xlu0 %v288, 6
      %v493 = vpop.permute.xlu0 %492
      %494 = vrot.lane.b32.xlu0 %v289, 6
      %v495 = vpop.permute.xlu0 %494
      %496 = vrot.lane.b32.xlu0 %v290, 6
      %v497 = vpop.permute.xlu0 %496
      %vm498 = vcmp.lt.s32.totalorder %v301, 6
      %v499 = vsel %vm498, %v495, %v497
      %v500 = vsel %vm498, %v493, %v495
      %501 = vst [vmem:[%s412 + $0x80] sm:$0xff] %v500
      %502 = vst [vmem:[%s412 + $0x88] sm:$0xff] %v499
      %s503 = scalar_lea.vmem %s2, 8
      %v504 = vld [vmem:[%s503] sm:$0xff]
      %v505 = vld [vmem:[%s412] sm:$0xff]
      %v506 = vld [vmem:[%s412 + $0x8] sm:$0xff]
      %v507 = vld [vmem:[%s412 + $0x10] sm:$0xff]
      %v508 = vld [vmem:[%s412 + $0x18] sm:$0xff]
      %v509 = vld [vmem:[%s412 + $0x20] sm:$0xff]
      %v510 = vld [vmem:[%s412 + $0x28] sm:$0xff]
      %v511 = vld [vmem:[%s412 + $0x30] sm:$0xff]
      %v512 = vld [vmem:[%s412 + $0x38] sm:$0xff]
      %v513 = vld [vmem:[%s412 + $0x40] sm:$0xff]
      %v514 = vld [vmem:[%s412 + $0x48] sm:$0xff]
      %v515 = vld [vmem:[%s412 + $0x50] sm:$0xff]
      %v516 = vld [vmem:[%s412 + $0x58] sm:$0xff]
      %v517 = vld [vmem:[%s412 + $0x60] sm:$0xff]
      %v518 = vld [vmem:[%s412 + $0x68] sm:$0xff]
      %v519 = vld [vmem:[%s412 + $0x70] sm:$0xff]
      %v520 = vld [vmem:[%s412 + $0x78] sm:$0xff]
      %v521 = vld [vmem:[%s412 + $0x80] sm:$0xff]
      %v522 = vld [vmem:[%s412 + $0x88] sm:$0xff]
      %vm523 = vcmask 588800
      %v525 = vsel %vm523, %v504, 0
      %527 = vmatprep.subr.mxu0 0.0
      %528 = vmatpush1.msra.mxu0 0.0
      %529 = vmatprep.subr.mxu0 0.0
      %530 = vmatpush1.msra.mxu0 0.0
      %531 = vmatprep.subr.mxu0 0.0
      %532 = vmatpush1.msra.mxu0 0.0
      %533 = vmatprep.subr.mxu0 0.0
      %534 = vmatpush1.msra.mxu0 0.0
      %535 = vmatprep.subr.mxu0 0.0
      %536 = vmatpush1.msra.mxu0 0.0
      %537 = vmatprep.subr.mxu0 0.0
      %538 = vmatpush1.msra.mxu0 0.0
      %539 = vmatprep.subr.mxu0 0.0
      %540 = vmatpush1.msra.mxu0 0.0
      %541 = vmatprep.subr.mxu0 %v522
      %542 = vmatpush1.msra.mxu0 %v521
      %543 = vmatprep.subr.mxu0 %v520
      %544 = vmatpush1.msra.mxu0 %v519
      %545 = vmatprep.subr.mxu0 %v518
      %546 = vmatpush1.msra.mxu0 %v517
      %547 = vmatprep.subr.mxu0 %v516
      %548 = vmatpush1.msra.mxu0 %v515
      %549 = vmatprep.subr.mxu0 %v514
      %550 = vmatpush1.msra.mxu0 %v513
      %551 = vmatprep.subr.mxu0 %v512
      %552 = vmatpush1.msra.mxu0 %v511
      %553 = vmatprep.subr.mxu0 %v510
      %554 = vmatpush1.msra.mxu0 %v509
      %555 = vmatprep.subr.mxu0 %v508
      %556 = vmatpush1.msra.mxu0 %v507
      %557 = vmatprep.subr.mxu0 %v506
      %558 = vmatpush1.msra.mxu0 %v505
      %559 = vmatprep.subr.mxu0 0.0
      %560 = vmatpush2.msra.mxu0 0.0
      %561 = vmatprep.subr.mxu0 0.0
      %562 = vmatpush2.msra.mxu0 0.0
      %563 = vmatprep.subr.mxu0 0.0
      %564 = vmatpush2.msra.mxu0 0.0
      %565 = vmatprep.subr.mxu0 0.0
      %566 = vmatpush2.msra.mxu0 0.0
      %567 = vmatprep.subr.mxu0 0.0
      %568 = vmatpush2.msra.mxu0 0.0
      %569 = vmatprep.subr.mxu0 0.0
      %570 = vmatpush2.msra.mxu0 0.0
      %571 = vmatprep.subr.mxu0 0.0
      %572 = vmatpush2.msra.mxu0 0.0
      %573 = vmatprep.subr.mxu0 0.0
      %574 = vmatpush2.msra.mxu0 0.0
      %575 = vmatprep.subr.mxu0 0.0
      %576 = vmatpush2.msra.mxu0 0.0
      %577 = vmatprep.subr.mxu0 0.0
      %578 = vmatpush2.msra.mxu0 0.0
      %579 = vmatprep.subr.mxu0 0.0
      %580 = vmatpush2.msra.mxu0 0.0
      %581 = vmatprep.subr.mxu0 0.0
      %582 = vmatpush2.msra.mxu0 0.0
      %583 = vmatprep.subr.mxu0 0.0
      %584 = vmatpush2.msra.mxu0 0.0
      %585 = vmatprep.subr.mxu0 0.0
      %586 = vmatpush2.msra.mxu0 0.0
      %587 = vmatprep.subr.mxu0 0.0
      %588 = vmatpush2.msra.mxu0 0.0
      %589 = vmatprep.subr.mxu0 0.0
      %590 = vmatpush2.msra.mxu0 0.0
      %591 = vmatprep.mubr.f32.mxu0 0.0
      %592 = vmatmul.mubr.f32.gmra.mxu0 %v525
      %v593 = vpop.f32.mrf.mxu0
      %v594 = vadd.f32 0.0, %v593
      %v595 = vpop.f32.mrf.mxu0
      %v596 = vadd.f32 0.0, %v595
      %597 = vdwg.mxu0
      %v599 = vsel %vm523, %v384, 0
      %601 = vmatprep.subr.mxu0 0.0
      %602 = vmatpush1.msra.mxu0 0.0
      %603 = vmatprep.subr.mxu0 0.0
      %604 = vmatpush1.msra.mxu0 0.0
      %605 = vmatprep.subr.mxu0 0.0
      %606 = vmatpush1.msra.mxu0 0.0
      %607 = vmatprep.subr.mxu0 0.0
      %608 = vmatpush1.msra.mxu0 0.0
      %609 = vmatprep.subr.mxu0 0.0
      %610 = vmatpush1.msra.mxu0 0.0
      %611 = vmatprep.subr.mxu0 0.0
      %612 = vmatpush1.msra.mxu0 0.0
      %613 = vmatprep.subr.mxu0 0.0
      %614 = vmatpush1.msra.mxu0 0.0
      %615 = vmatprep.subr.mxu0 %v402
      %616 = vmatpush1.msra.mxu0 %v401
      %617 = vmatprep.subr.mxu0 %v400
      %618 = vmatpush1.msra.mxu0 %v399
      %619 = vmatprep.subr.mxu0 %v398
      %620 = vmatpush1.msra.mxu0 %v397
      %621 = vmatprep.subr.mxu0 %v396
      %622 = vmatpush1.msra.mxu0 %v395
      %623 = vmatprep.subr.mxu0 %v394
      %624 = vmatpush1.msra.mxu0 %v393
      %625 = vmatprep.subr.mxu0 %v392
      %626 = vmatpush1.msra.mxu0 %v391
      %627 = vmatprep.subr.mxu0 %v390
      %628 = vmatpush1.msra.mxu0 %v389
      %629 = vmatprep.subr.mxu0 %v388
      %630 = vmatpush1.msra.mxu0 %v387
      %631 = vmatprep.subr.mxu0 %v386
      %632 = vmatpush1.msra.mxu0 %v385
      %633 = vmatprep.subr.mxu0 0.0
      %634 = vmatpush2.msra.mxu0 0.0
      %635 = vmatprep.subr.mxu0 0.0
      %636 = vmatpush2.msra.mxu0 0.0
      %637 = vmatprep.subr.mxu0 0.0
      %638 = vmatpush2.msra.mxu0 0.0
      %639 = vmatprep.subr.mxu0 0.0
      %640 = vmatpush2.msra.mxu0 0.0
      %641 = vmatprep.subr.mxu0 0.0
      %642 = vmatpush2.msra.mxu0 0.0
      %643 = vmatprep.subr.mxu0 0.0
      %644 = vmatpush2.msra.mxu0 0.0
      %645 = vmatprep.subr.mxu0 0.0
      %646 = vmatpush2.msra.mxu0 0.0
      %647 = vmatprep.subr.mxu0 0.0
      %648 = vmatpush2.msra.mxu0 0.0
      %649 = vmatprep.subr.mxu0 0.0
      %650 = vmatpush2.msra.mxu0 0.0
      %651 = vmatprep.subr.mxu0 0.0
      %652 = vmatpush2.msra.mxu0 0.0
      %653 = vmatprep.subr.mxu0 0.0
      %654 = vmatpush2.msra.mxu0 0.0
      %655 = vmatprep.subr.mxu0 0.0
      %656 = vmatpush2.msra.mxu0 0.0
      %657 = vmatprep.subr.mxu0 0.0
      %658 = vmatpush2.msra.mxu0 0.0
      %659 = vmatprep.subr.mxu0 0.0
      %660 = vmatpush2.msra.mxu0 0.0
      %661 = vmatprep.subr.mxu0 0.0
      %662 = vmatpush2.msra.mxu0 0.0
      %663 = vmatprep.subr.mxu0 0.0
      %664 = vmatpush2.msra.mxu0 0.0
      %665 = vmatprep.mubr.f32.mxu0 0.0
      %666 = vmatmul.mubr.f32.gmra.mxu0 %v599
      %v667 = vpop.f32.mrf.mxu0
      %v668 = vadd.f32 %v594, %v667
      %v669 = vpop.f32.mrf.mxu0
      %v670 = vadd.f32 %v596, %v669
      %671 = vdwg.mxu0
      %672 = vrot.lane.b32.xlu0 %v289, 56
      %v673 = vpop.permute.xlu0 %672
      %674 = vrot.lane.b32.xlu0 %v290, 56
      %v675 = vpop.permute.xlu0 %674
      %676 = vrot.lane.b32.xlu0 %v291, 56
      %v677 = vpop.permute.xlu0 %676
      %vm678 = vcmp.lt.s32.totalorder %v301, 56
      %v679 = vsel %vm678, %v675, %v677
      %v680 = vsel %vm678, %v673, %v675
      %s681 = scalar_lea.vmem [#allocation3], 288
      %682 = vst [vmem:[%s681] sm:$0xff] %v680
      %683 = vst [vmem:[%s681 + $0x8] sm:$0xff] %v679
      %684 = vrot.lane.b32.xlu0 %v289, 55
      %v685 = vpop.permute.xlu0 %684
      %686 = vrot.lane.b32.xlu0 %v290, 55
      %v687 = vpop.permute.xlu0 %686
      %688 = vrot.lane.b32.xlu0 %v291, 55
      %v689 = vpop.permute.xlu0 %688
      %vm690 = vcmp.lt.s32.totalorder %v301, 55
      %v691 = vsel %vm690, %v687, %v689
      %v692 = vsel %vm690, %v685, %v687
      %693 = vst [vmem:[%s681 + $0x10] sm:$0xff] %v692
      %694 = vst [vmem:[%s681 + $0x18] sm:$0xff] %v691
      %695 = vrot.lane.b32.xlu0 %v289, 54
      %v696 = vpop.permute.xlu0 %695
      %697 = vrot.lane.b32.xlu0 %v290, 54
      %v698 = vpop.permute.xlu0 %697
      %699 = vrot.lane.b32.xlu0 %v291, 54
      %v700 = vpop.permute.xlu0 %699
      %vm701 = vcmp.lt.s32.totalorder %v301, 54
      %v702 = vsel %vm701, %v698, %v700
      %v703 = vsel %vm701, %v696, %v698
      %704 = vst [vmem:[%s681 + $0x20] sm:$0xff] %v703
      %705 = vst [vmem:[%s681 + $0x28] sm:$0xff] %v702
      %706 = vrot.lane.b32.xlu0 %v289, 46
      %v707 = vpop.permute.xlu0 %706
      %708 = vrot.lane.b32.xlu0 %v290, 46
      %v709 = vpop.permute.xlu0 %708
      %710 = vrot.lane.b32.xlu0 %v291, 46
      %v711 = vpop.permute.xlu0 %710
      %vm712 = vcmp.lt.s32.totalorder %v301, 46
      %v713 = vsel %vm712, %v709, %v711
      %v714 = vsel %vm712, %v707, %v709
      %715 = vst [vmem:[%s681 + $0x30] sm:$0xff] %v714
      %716 = vst [vmem:[%s681 + $0x38] sm:$0xff] %v713
      %717 = vrot.lane.b32.xlu0 %v289, 45
      %v718 = vpop.permute.xlu0 %717
      %719 = vrot.lane.b32.xlu0 %v290, 45
      %v720 = vpop.permute.xlu0 %719
      %721 = vrot.lane.b32.xlu0 %v291, 45
      %v722 = vpop.permute.xlu0 %721
      %vm723 = vcmp.lt.s32.totalorder %v301, 45
      %v724 = vsel %vm723, %v720, %v722
      %v725 = vsel %vm723, %v718, %v720
      %726 = vst [vmem:[%s681 + $0x40] sm:$0xff] %v725
      %727 = vst [vmem:[%s681 + $0x48] sm:$0xff] %v724
      %728 = vrot.lane.b32.xlu0 %v289, 44
      %v729 = vpop.permute.xlu0 %728
      %730 = vrot.lane.b32.xlu0 %v290, 44
      %v731 = vpop.permute.xlu0 %730
      %732 = vrot.lane.b32.xlu0 %v291, 44
      %v733 = vpop.permute.xlu0 %732
      %vm734 = vcmp.lt.s32.totalorder %v301, 44
      %v735 = vsel %vm734, %v731, %v733
      %v736 = vsel %vm734, %v729, %v731
      %737 = vst [vmem:[%s681 + $0x50] sm:$0xff] %v736
      %738 = vst [vmem:[%s681 + $0x58] sm:$0xff] %v735
      %739 = vrot.lane.b32.xlu0 %v289, 36
      %v740 = vpop.permute.xlu0 %739
      %741 = vrot.lane.b32.xlu0 %v290, 36
      %v742 = vpop.permute.xlu0 %741
      %743 = vrot.lane.b32.xlu0 %v291, 36
      %v744 = vpop.permute.xlu0 %743
      %vm745 = vcmp.lt.s32.totalorder %v301, 36
      %v746 = vsel %vm745, %v742, %v744
      %v747 = vsel %vm745, %v740, %v742
      %748 = vst [vmem:[%s681 + $0x60] sm:$0xff] %v747
      %749 = vst [vmem:[%s681 + $0x68] sm:$0xff] %v746
      %750 = vrot.lane.b32.xlu0 %v289, 35
      %v751 = vpop.permute.xlu0 %750
      %752 = vrot.lane.b32.xlu0 %v290, 35
      %v753 = vpop.permute.xlu0 %752
      %754 = vrot.lane.b32.xlu0 %v291, 35
      %v755 = vpop.permute.xlu0 %754
      %vm756 = vcmp.lt.s32.totalorder %v301, 35
      %v757 = vsel %vm756, %v753, %v755
      %v758 = vsel %vm756, %v751, %v753
      %759 = vst [vmem:[%s681 + $0x70] sm:$0xff] %v758
      %760 = vst [vmem:[%s681 + $0x78] sm:$0xff] %v757
      %761 = vrot.lane.b32.xlu0 %v289, 34
      %v762 = vpop.permute.xlu0 %761
      %763 = vrot.lane.b32.xlu0 %v290, 34
      %v764 = vpop.permute.xlu0 %763
      %765 = vrot.lane.b32.xlu0 %v291, 34
      %v766 = vpop.permute.xlu0 %765
      %vm767 = vcmp.lt.s32.totalorder %v301, 34
      %v768 = vsel %vm767, %v764, %v766
      %v769 = vsel %vm767, %v762, %v764
      %770 = vst [vmem:[%s681 + $0x80] sm:$0xff] %v769
      %771 = vst [vmem:[%s681 + $0x88] sm:$0xff] %v768
      %s772 = scalar_lea.vmem %s2, 16
      %v773 = vld [vmem:[%s772] sm:$0xff]
      %v774 = vld [vmem:[%s681] sm:$0xff]
      %v775 = vld [vmem:[%s681 + $0x8] sm:$0xff]
      %v776 = vld [vmem:[%s681 + $0x10] sm:$0xff]
      %v777 = vld [vmem:[%s681 + $0x18] sm:$0xff]
      %v778 = vld [vmem:[%s681 + $0x20] sm:$0xff]
      %v779 = vld [vmem:[%s681 + $0x28] sm:$0xff]
      %v780 = vld [vmem:[%s681 + $0x30] sm:$0xff]
      %v781 = vld [vmem:[%s681 + $0x38] sm:$0xff]
      %v782 = vld [vmem:[%s681 + $0x40] sm:$0xff]
      %v783 = vld [vmem:[%s681 + $0x48] sm:$0xff]
      %v784 = vld [vmem:[%s681 + $0x50] sm:$0xff]
      %v785 = vld [vmem:[%s681 + $0x58] sm:$0xff]
      %v786 = vld [vmem:[%s681 + $0x60] sm:$0xff]
      %v787 = vld [vmem:[%s681 + $0x68] sm:$0xff]
      %v788 = vld [vmem:[%s681 + $0x70] sm:$0xff]
      %v789 = vld [vmem:[%s681 + $0x78] sm:$0xff]
      %v790 = vld [vmem:[%s681 + $0x80] sm:$0xff]
      %v791 = vld [vmem:[%s681 + $0x88] sm:$0xff]
      %v793 = vsel %vm523, %v773, 0
      %795 = vmatprep.subr.mxu0 0.0
      %796 = vmatpush1.msra.mxu0 0.0
      %797 = vmatprep.subr.mxu0 0.0
      %798 = vmatpush1.msra.mxu0 0.0
      %799 = vmatprep.subr.mxu0 0.0
      %800 = vmatpush1.msra.mxu0 0.0
      %801 = vmatprep.subr.mxu0 0.0
      %802 = vmatpush1.msra.mxu0 0.0
      %803 = vmatprep.subr.mxu0 0.0
      %804 = vmatpush1.msra.mxu0 0.0
      %805 = vmatprep.subr.mxu0 0.0
      %806 = vmatpush1.msra.mxu0 0.0
      %807 = vmatprep.subr.mxu0 0.0
      %808 = vmatpush1.msra.mxu0 0.0
      %809 = vmatprep.subr.mxu0 %v791
      %810 = vmatpush1.msra.mxu0 %v790
      %811 = vmatprep.subr.mxu0 %v789
      %812 = vmatpush1.msra.mxu0 %v788
      %813 = vmatprep.subr.mxu0 %v787
      %814 = vmatpush1.msra.mxu0 %v786
      %815 = vmatprep.subr.mxu0 %v785
      %816 = vmatpush1.msra.mxu0 %v784
      %817 = vmatprep.subr.mxu0 %v783
      %818 = vmatpush1.msra.mxu0 %v782
      %819 = vmatprep.subr.mxu0 %v781
      %820 = vmatpush1.msra.mxu0 %v780
      %821 = vmatprep.subr.mxu0 %v779
      %822 = vmatpush1.msra.mxu0 %v778
      %823 = vmatprep.subr.mxu0 %v777
      %824 = vmatpush1.msra.mxu0 %v776
      %825 = vmatprep.subr.mxu0 %v775
      %826 = vmatpush1.msra.mxu0 %v774
      %827 = vmatprep.subr.mxu0 0.0
      %828 = vmatpush2.msra.mxu0 0.0
      %829 = vmatprep.subr.mxu0 0.0
      %830 = vmatpush2.msra.mxu0 0.0
      %831 = vmatprep.subr.mxu0 0.0
      %832 = vmatpush2.msra.mxu0 0.0
      %833 = vmatprep.subr.mxu0 0.0
      %834 = vmatpush2.msra.mxu0 0.0
      %835 = vmatprep.subr.mxu0 0.0
      %836 = vmatpush2.msra.mxu0 0.0
      %837 = vmatprep.subr.mxu0 0.0
      %838 = vmatpush2.msra.mxu0 0.0
      %839 = vmatprep.subr.mxu0 0.0
      %840 = vmatpush2.msra.mxu0 0.0
      %841 = vmatprep.subr.mxu0 0.0
      %842 = vmatpush2.msra.mxu0 0.0
      %843 = vmatprep.subr.mxu0 0.0
      %844 = vmatpush2.msra.mxu0 0.0
      %845 = vmatprep.subr.mxu0 0.0
      %846 = vmatpush2.msra.mxu0 0.0
      %847 = vmatprep.subr.mxu0 0.0
      %848 = vmatpush2.msra.mxu0 0.0
      %849 = vmatprep.subr.mxu0 0.0
      %850 = vmatpush2.msra.mxu0 0.0
      %851 = vmatprep.subr.mxu0 0.0
      %852 = vmatpush2.msra.mxu0 0.0
      %853 = vmatprep.subr.mxu0 0.0
      %854 = vmatpush2.msra.mxu0 0.0
      %855 = vmatprep.subr.mxu0 0.0
      %856 = vmatpush2.msra.mxu0 0.0
      %857 = vmatprep.subr.mxu0 0.0
      %858 = vmatpush2.msra.mxu0 0.0
      %859 = vmatprep.mubr.f32.mxu0 0.0
      %860 = vmatmul.mubr.f32.gmra.mxu0 %v793
      %v861 = vpop.f32.mrf.mxu0
      %v862 = vadd.f32 0.0, %v861
      %v863 = vpop.f32.mrf.mxu0
      %v864 = vadd.f32 0.0, %v863
      %865 = vdwg.mxu0
      %v866 = vadd.f32 %v668, %v862
      %v867 = vadd.f32 %v670, %v864
      %v868 = vld [vmem:[%s3] sm:$0xff]
      %870 = vset.pattern.permute.xlu0 0
      %871 = vperm.xlu0 %870, %v868
      %v872 = vpop.permute.xlu0 %871
      %v874 = vadd.f32 %v866, %v872
      %v875 = vadd.f32 %v867, %v872
      %876 = vst [vmem:[%s278] sm:$0xff] %v874
      %877 = vst [vmem:[%s278 + $0x8] sm:$0xff] %v875
      %s878 = smul.u32 2, %s20
      %p879 = scmp.lt.s32.totalorder %s19, 1
      %s880 = scalar_select %p879, %s19, 1
      %p881 = scmp.lt.s32.totalorder %s878, 7
      %s882 = scalar_select %p881, %s878, 7
      %s883 = smul.addr %s880, 8
      %s884 = sadd.s32 %s882, %s883
      %s885 = smul.addr %s884, 8
      %s886 = scalar_lea.vmem %s4, %s885
      // Predicated region
      $region37: #{down_forward.2} parent=35 // pred_check
        %p887 = pneg %p147
      $region38: #{down_forward.2} parent=35 // pred_check_branch
        %889 = sbr.rel (%p887) target = $region40
      $region39: #{down_forward.2} parent=35 // pred_region
        %s890 = smul.u32 2, %s20
      $region40: #{down_forward.2} parent=35 // pred_fallthru
        _
    $region36: #{down_forward.2} parent=5 // pred_fallthru
      _
    %p891 = scmp.le.s32.totalorder 2, %s10
    // Predicated region
    $region41: #{down_forward.2} parent=5 // pred_check
      %p892 = pneg %p891
    $region42: #{down_forward.2} parent=5 // pred_check_branch
      %894 = sbr.rel (%p892) target = $region44
    $region43: #{down_forward.2} parent=5 // pred_region
      %s895 = ssub.s32 %s10, 2
      // Predicated region
      $region45: #{down_forward.2} parent=43 // pred_check
        %p896 = pneg %p153
      $region46: #{down_forward.2} parent=43 // pred_check_branch
        %898 = sbr.rel (%p896) target = $region48
      $region47: #{down_forward.2} parent=43 // pred_region
        %s899 = smul.u32 2, %s22
        %p900 = scmp.lt.s32.totalorder %s21, 1
        %s901 = scalar_select %p900, %s21, 1
        %p902 = scmp.lt.s32.totalorder %s899, 7
        %s903 = scalar_select %p902, %s899, 7
        %s904 = smul.addr %s901, 8
        %s905 = sadd.s32 %s903, %s904
        %s906 = smul.addr %s905, 8
        %s907 = scalar_lea.vmem %s4, %s906
      $region48: #{down_forward.2} parent=43 // pred_fallthru
        _
    $region44: #{down_forward.2} parent=5 // pred_fallthru
      _
  $region6: #{down_forward.2} parent=0 // loop_footer
    %s14 = sadd.s32 1, %s10
  $region7: #{down_forward.2} parent=0 // loop_footer_branch
    %9 = sbr.rel target = $region3
  $region8: #{down_forward.2} parent=0 // loop_exit
    _

</llo_original>
